<compile_context>
chip_gen: v6e
topology: v6e:2x2x1
jax: 0.10.0
libtpu: 0.0.40
codegen_flags: <defaults>
</compile_context>

<pallas_src>
import functools
import math

import jax
import jax.numpy as jnp
from jax import lax
from jax.experimental import pallas as pl
from jax.experimental.pallas import tpu as pltpu


LN_EPS = 1e-5                       # nn.LayerNorm default
_INV_SQRT2 = 1.0 / math.sqrt(2.0)
_GELU_C = math.sqrt(2.0 / math.pi)


def _layernorm(x, gamma, beta):
    # x: (M, D); gamma/beta: (1, D)
    mu = jnp.mean(x, axis=-1, keepdims=True)
    xc = x - mu
    var = jnp.mean(xc * xc, axis=-1, keepdims=True)
    return xc * lax.rsqrt(var + LN_EPS) * gamma + beta


def _gelu(x, approx):
    if approx:
        # tanh form goes to the EUP slot (overlaps MXU/VALU); slight numeric delta
        return 0.5 * x * (1.0 + jnp.tanh(_GELU_C * (x + 0.044715 * x * x * x)))
    # exact erf formulation == nn.GELU() default
    return 0.5 * x * (1.0 + lax.erf(x * _INV_SQRT2))


def gmlp_stack_kernel(
    x_ref,        # (bt, S, d_model)  input activation block (read at layer 0)
    ln1_g_ref,    # (1, 1, d_model)
    ln1_b_ref,    # (1, 1, d_model)
    w1u_ref,      # (1, d_model, d_half)   pre-transposed "u" half of proj_1
    b1u_ref,      # (1, 1, d_half)
    w1v_ref,      # (1, d_model, d_half)   pre-transposed "v" half of proj_1
    b1v_ref,      # (1, 1, d_half)
    lns_g_ref,    # (1, 1, d_half)
    lns_b_ref,    # (1, 1, d_half)
    wp_ref,       # (1, S, S)              spatial proj weight (not transposed)
    bp_ref,       # (1, S, 1)
    w2_ref,       # (1, d_half, d_model)   pre-transposed proj_2 weight
    b2_ref,       # (1, 1, d_model)
    o_ref,        # (bt, S, d_model)  carried activation / final output
    *,
    approx_gelu,
):
    layer = pl.program_id(1)

    # Layer 0: seed the VMEM-resident activation (the output block, which keeps
    # the same block index across the whole layer axis) from the input.
    @pl.when(layer == 0)
    def _():
        o_ref[...] = x_ref[...]

    bt, S, D = o_ref.shape
    d_half = w1u_ref.shape[-1]
    cdt = w1u_ref.dtype            # matmul operand dtype (f32 or bf16)

    x3 = o_ref[...]                # (bt, S, D) f32, previous layer's output
    x2 = x3.reshape(bt * S, D)     # channel matmuls run with M = bt*S

    # --- pre-norm + channel projection (split: u / v produced directly) -----
    xn = _layernorm(x2, ln1_g_ref[0], ln1_b_ref[0]).astype(cdt)
    u = jnp.dot(xn, w1u_ref[0], preferred_element_type=jnp.float32) + b1u_ref[0]
    v = jnp.dot(xn, w1v_ref[0], preferred_element_type=jnp.float32) + b1v_ref[0]
    u = _gelu(u, approx_gelu)      # (bt*S, d_half)
    v = _gelu(v, approx_gelu)      # (bt*S, d_half)

    # --- Spatial Gating Unit -------------------------------------------------
    vn = _layernorm(v, lns_g_ref[0], lns_b_ref[0]).astype(cdt)
    wp = wp_ref[0]                                        # (S, S), cdt
    bp = jnp.broadcast_to(bp_ref[0], (S, d_half))         # hoisted broadcast

    gated_parts = []
    for i in range(bt):            # static, small; only the (S,S) matmul is per-batch
        lo, hi = i * S, (i + 1) * S
        # permute(0,2,1) @ Wp^T + bp, permuted back  ==  Wp @ vn_i + bp[:, None]
        vp = jnp.dot(wp, vn[lo:hi, :], preferred_element_type=jnp.float32) + bp
        gated_parts.append(u[lo:hi, :] * vp)
    gated = gated_parts[0] if bt == 1 else jnp.concatenate(gated_parts, axis=0)

    # --- output projection + residual ---------------------------------------
    out = jnp.dot(gated.astype(cdt), w2_ref[0],
                  preferred_element_type=jnp.float32)
    out = out + b2_ref[0] + x2
    o_ref[...] = out.reshape(bt, S, D)


def gmlp_forward(x, all_params, *, compute_dtype=jnp.float32,
                 batch_tile=None, approx_gelu=False):
    """x: (B, S, d_model) float32. all_params: list of per-block weight dicts."""
    B, S, D = x.shape
    L = len(all_params)
    d_ffn = all_params[0]["w1"].shape[0]
    d_half = d_ffn // 2

    if batch_tile is None:
        batch_tile = 1 if B > 1 else B   # keep a >=2 "parallel" axis when possible
    bt = batch_tile
    assert B % bt == 0, "batch must be divisible by batch_tile"

    stack = lambda name: jnp.stack([p[name] for p in all_params])

    # Pre-transpose / pre-split weights in the wrapper so every in-kernel matmul
    # is a plain row-major dot; cast matmul weights to compute_dtype.
    w1 = stack("w1")                                                 # (L, d_ffn, D)
    w1u_t = jnp.transpose(w1[:, :d_half, :], (0, 2, 1)).astype(compute_dtype)
    w1v_t = jnp.transpose(w1[:, d_half:, :], (0, 2, 1)).astype(compute_dtype)
    b1 = stack("b1")
    b1u = b1[:, :d_half].reshape(L, 1, d_half)
    b1v = b1[:, d_half:].reshape(L, 1, d_half)
    wp = stack("wp").astype(compute_dtype)                            # (L, S, S)
    bp = stack("bp").reshape(L, S, 1)
    w2_t = jnp.transpose(stack("w2"), (0, 2, 1)).astype(compute_dtype)  # (L, d_half, D)
    b2 = stack("b2").reshape(L, 1, D)
    ln1_g = stack("ln1_g").reshape(L, 1, D)
    ln1_b = stack("ln1_b").reshape(L, 1, D)
    lns_g = stack("lns_g").reshape(L, 1, d_half)
    lns_b = stack("lns_b").reshape(L, 1, d_half)

    act_spec = pl.BlockSpec((bt, S, D), lambda b, l: (b, 0, 0))
    per_layer = lambda shape: pl.BlockSpec((1,) + shape, lambda b, l: (l, 0, 0))

    wbytes = jnp.dtype(compute_dtype).itemsize
    flops = 2 * B * S * L * (D * d_ffn + S * d_half + d_half * D)
    transcendentals = B * S * d_ffn * L
    bytes_accessed = int(2 * B * S * D * 4
                         + (B // bt) * L * (D * d_ffn + S * S + d_half * D) * wbytes)

    kernel = functools.partial(gmlp_stack_kernel, approx_gelu=approx_gelu)

    return pl.pallas_call(
        kernel,
        out_shape=jax.ShapeDtypeStruct((B, S, D), jnp.float32),
        grid_spec=pltpu.PrefetchScalarGridSpec(
            num_scalar_prefetch=0,
            grid=(B // bt, L),                 # layer axis innermost (sequential)
            in_specs=[
                act_spec,
                per_layer((1, D)),             # ln1 gamma
                per_layer((1, D)),             # ln1 beta
                per_layer((D, d_half)),        # W1^T (u half)
                per_layer((1, d_half)),        # b1 (u half)
                per_layer((D, d_half)),        # W1^T (v half)
                per_layer((1, d_half)),        # b1 (v half)
                per_layer((1, d_half)),        # sgu ln gamma
                per_layer((1, d_half)),        # sgu ln beta
                per_layer((S, S)),             # Wp
                per_layer((S, 1)),             # bp
                per_layer((d_half, D)),        # W2^T
                per_layer((1, D)),             # b2
            ],
            out_specs=act_spec,
        ),
        compiler_params=pltpu.CompilerParams(
            dimension_semantics=("parallel", "arbitrary"),
            # Explicit scoped-VMEM budget (safe on v5e/v6e/v7x for these tiles).
            vmem_limit_bytes=32 * 1024 * 1024,
        ),
        cost_estimate=pl.CostEstimate(
            flops=flops, transcendentals=transcendentals,
            bytes_accessed=bytes_accessed),
    )(x, ln1_g, ln1_b, w1u_t, b1u, w1v_t, b1v, lns_g, lns_b, wp, bp, w2_t, b2)


# ---------------------------------------------------------------------------
# Pure-JAX reference (mirrors the PyTorch forward in eval mode).
# ---------------------------------------------------------------------------
def _ref_layernorm(x, g, b):
    mu = x.mean(-1, keepdims=True)
    var = ((x - mu) ** 2).mean(-1, keepdims=True)
    return (x - mu) / jnp.sqrt(var + LN_EPS) * g + b


def ref_block(x, p):
    hp = jax.lax.Precision.HIGHEST
    d_half = p["w1"].shape[0] // 2
    shortcut = x
    h = _ref_layernorm(x, p["ln1_g"], p["ln1_b"])
    h = jnp.matmul(h, p["w1"].T, precision=hp) + p["b1"]
    h = 0.5 * h * (1.0 + lax.erf(h * _INV_SQRT2))
    u, v = h[..., :d_half], h[..., d_half:]
    v = _ref_layernorm(v, p["lns_g"], p["lns_b"])
    v = jnp.matmul(jnp.transpose(v, (0, 2, 1)), p["wp"].T, precision=hp) + p["bp"]
    v = jnp.transpose(v, (0, 2, 1))
    g = u * v
    out = jnp.matmul(g, p["w2"].T, precision=hp) + p["b2"]
    return out + shortcut


def ref_forward(x, all_params):
    for p in all_params:
        x = ref_block(x, p)
    return x


# ---------------------------------------------------------------------------
def init_params(key, d_model, d_ffn, seq_len, n_blocks):
    d_half = d_ffn // 2
    all_params = []
    for _ in range(n_blocks):
        keys = jax.random.split(key, 7)
        key = keys[0]
        s1 = 1.0 / math.sqrt(d_model)
        sp = 1.0 / math.sqrt(seq_len)
        s2 = 1.0 / math.sqrt(d_half)
        p = {
            "ln1_g": jnp.ones((d_model,), jnp.float32),
            "ln1_b": jnp.zeros((d_model,), jnp.float32),
            "w1": jax.random.uniform(keys[1], (d_ffn, d_model), jnp.float32, -s1, s1),
            "b1": jax.random.uniform(keys[2], (d_ffn,), jnp.float32, -s1, s1),
            "lns_g": jnp.ones((d_half,), jnp.float32),
            "lns_b": jnp.zeros((d_half,), jnp.float32),
            "wp": jax.random.uniform(keys[3], (seq_len, seq_len), jnp.float32, -sp, sp),
            "bp": jax.random.uniform(keys[4], (seq_len,), jnp.float32, -sp, sp),
            "w2": jax.random.uniform(keys[5], (d_model, d_half), jnp.float32, -s2, s2),
            "b2": jax.random.uniform(keys[6], (d_model,), jnp.float32, -s2, s2),
        }
        all_params.append(p)
    return all_params


if __name__ == "__main__":
    # Small but lane-dense shapes: d_model = d_half = 128, S multiple of 8.
    B, S, D_MODEL, D_FFN, N_BLOCKS = 4, 16, 128, 256, 3

    key = jax.random.PRNGKey(0)
    kx, kp = jax.random.split(key)
    x = jax.random.normal(kx, (B, S, D_MODEL), jnp.float32)
    params = init_params(kp, D_MODEL, D_FFN, S, N_BLOCKS)

    # TODO(synk): stochastic depth (training-time Bernoulli skip) is a no-op in
    # eval mode and is therefore not implemented in the kernel.

    ref = ref_forward(x, params)

    # f32 path (matches nn.GELU / f32 Linear numerics; tolerance allows for
    # MXU multi-pass f32 matmul rounding vs. the HIGHEST-precision reference).
    out = gmlp_forward(x, params, compute_dtype=jnp.float32, batch_tile=2)
    out = jax.block_until_ready(out)
    assert out.shape == (B, S, D_MODEL)
    assert bool(jnp.allclose(out, ref, rtol=2e-2, atol=2e-2)), (
        float(jnp.max(jnp.abs(out - ref))))

    # bf16 matmul-operand path (f32 accumulation): ~2x MXU throughput and half
    # the weight DMA bytes; numerics differ slightly from the f32 reference.
    out_bf16 = gmlp_forward(x, params, compute_dtype=jnp.bfloat16, batch_tile=2)
    out_bf16 = jax.block_until_ready(out_bf16)
    assert out_bf16.shape == (B, S, D_MODEL)
    assert bool(jnp.all(jnp.isfinite(out_bf16)))
    assert float(jnp.max(jnp.abs(out_bf16 - ref))) < 0.25

    print("KERNEL_OK")
</pallas_src>

<mosaic_0001>
module attributes {stable_mosaic.version = 11 : i64} {
  func.func @gmlp_stack_kernel(%arg0: i32, %arg1: i32, %arg2: memref<2x16x128xf32, #tpu.memory_space<vmem>>, %arg3: memref<1x1x128xf32, #tpu.memory_space<vmem>>, %arg4: memref<1x1x128xf32, #tpu.memory_space<vmem>>, %arg5: memref<1x128x128xf32, #tpu.memory_space<vmem>>, %arg6: memref<1x1x128xf32, #tpu.memory_space<vmem>>, %arg7: memref<1x128x128xf32, #tpu.memory_space<vmem>>, %arg8: memref<1x1x128xf32, #tpu.memory_space<vmem>>, %arg9: memref<1x1x128xf32, #tpu.memory_space<vmem>>, %arg10: memref<1x1x128xf32, #tpu.memory_space<vmem>>, %arg11: memref<1x16x16xf32, #tpu.memory_space<vmem>>, %arg12: memref<1x16x1xf32, #tpu.memory_space<vmem>>, %arg13: memref<1x128x128xf32, #tpu.memory_space<vmem>>, %arg14: memref<1x1x128xf32, #tpu.memory_space<vmem>>, %arg15: memref<2x16x128xf32, #tpu.memory_space<vmem>>) attributes {dimension_semantics = [#tpu.dimension_semantics<parallel>, #tpu.dimension_semantics<arbitrary>], iteration_bounds = array<i64: 2, 3>, scalar_prefetch = 0 : i64, scratch_operands = 0 : i64, tpu.core_type = #tpu.core_type<tc>, window_params = [{transform_indices = @transform_0, window_bounds = array<i64: 2, 16, 128>}, {transform_indices = @transform_1, window_bounds = array<i64: 1, 1, 128>}, {transform_indices = @transform_2, window_bounds = array<i64: 1, 1, 128>}, {transform_indices = @transform_3, window_bounds = array<i64: 1, 128, 128>}, {transform_indices = @transform_4, window_bounds = array<i64: 1, 1, 128>}, {transform_indices = @transform_5, window_bounds = array<i64: 1, 128, 128>}, {transform_indices = @transform_6, window_bounds = array<i64: 1, 1, 128>}, {transform_indices = @transform_7, window_bounds = array<i64: 1, 1, 128>}, {transform_indices = @transform_8, window_bounds = array<i64: 1, 1, 128>}, {transform_indices = @transform_9, window_bounds = array<i64: 1, 16, 16>}, {transform_indices = @transform_10, window_bounds = array<i64: 1, 16, 1>}, {transform_indices = @transform_11, window_bounds = array<i64: 1, 128, 128>}, {transform_indices = @transform_12, window_bounds = array<i64: 1, 1, 128>}, {transform_indices = @transform_13, window_bounds = array<i64: 2, 16, 128>}]} {
    %c0_i32 = arith.constant 0 : i32
    %0 = arith.cmpi eq, %arg1, %c0_i32 : i32
    %1 = arith.extui %0 : i1 to i32
    %c0_i32_0 = arith.constant 0 : i32
    %2 = arith.cmpi ne, %1, %c0_i32_0 : i32
    scf.if %2 {
      %c0_62 = arith.constant 0 : index
      %c0_63 = arith.constant 0 : index
      %c0_64 = arith.constant 0 : index
      %110 = vector.load %arg2[%c0_62, %c0_63, %c0_64] : memref<2x16x128xf32, #tpu.memory_space<vmem>>, vector<2x16x128xf32>
      %c0_65 = arith.constant 0 : index
      %c0_66 = arith.constant 0 : index
      %c0_67 = arith.constant 0 : index
      %111 = vector.load %arg15[%c0_65, %c0_66, %c0_67] : memref<2x16x128xf32, #tpu.memory_space<vmem>>, vector<2x16x128xf32>
      tpu.vector_store %arg15[%c0_65, %c0_66, %c0_67], %110 {strides = array<i32>} : memref<2x16x128xf32, #tpu.memory_space<vmem>>, vector<2x16x128xf32>,
    } else {
    }
    %c0 = arith.constant 0 : index
    %c0_1 = arith.constant 0 : index
    %c0_2 = arith.constant 0 : index
    %3 = vector.load %arg15[%c0, %c0_1, %c0_2] : memref<2x16x128xf32, #tpu.memory_space<vmem>>, vector<2x16x128xf32>
    %4 = vector.shape_cast %3 : vector<2x16x128xf32> to vector<32x128xf32>
    %c0_3 = arith.constant 0 : index
    %c0_4 = arith.constant 0 : index
    %c0_5 = arith.constant 0 : index
    %5 = vector.load %arg3[%c0_3, %c0_4, %c0_5] : memref<1x1x128xf32, #tpu.memory_space<vmem>>, vector<1x1x128xf32>
    %6 = vector.shape_cast %5 : vector<1x1x128xf32> to vector<1x128xf32>
    %c0_6 = arith.constant 0 : index
    %c0_7 = arith.constant 0 : index
    %c0_8 = arith.constant 0 : index
    %7 = vector.load %arg4[%c0_6, %c0_7, %c0_8] : memref<1x1x128xf32, #tpu.memory_space<vmem>>, vector<1x1x128xf32>
    %8 = vector.shape_cast %7 : vector<1x1x128xf32> to vector<1x128xf32>
    %cst = arith.constant dense<0.000000e+00> : vector<32xf32>
    %9 = vector.multi_reduction <add>, %4, %cst [1] : vector<32x128xf32> to vector<32xf32>
    %10 = vector.shape_cast %9 : vector<32xf32> to vector<32x1xf32>
    %cst_9 = arith.constant 1.280000e+02 : f32
    %11 = vector.broadcast %cst_9 : f32 to vector<32x1xf32>
    %12 = arith.divf %10, %11 : vector<32x1xf32>
    %13 = vector.broadcast %12 : vector<32x1xf32> to vector<32x128xf32>
    %14 = arith.subf %4, %13 : vector<32x128xf32>
    %15 = arith.mulf %14, %14 : vector<32x128xf32>
    %cst_10 = arith.constant dense<0.000000e+00> : vector<32xf32>
    %16 = vector.multi_reduction <add>, %15, %cst_10 [1] : vector<32x128xf32> to vector<32xf32>
    %17 = vector.shape_cast %16 : vector<32xf32> to vector<32x1xf32>
    %cst_11 = arith.constant 1.280000e+02 : f32
    %18 = vector.broadcast %cst_11 : f32 to vector<32x1xf32>
    %19 = arith.divf %17, %18 : vector<32x1xf32>
    %cst_12 = arith.constant 9.99999974E-6 : f32
    %20 = vector.broadcast %cst_12 : f32 to vector<32x1xf32>
    %21 = arith.addf %19, %20 : vector<32x1xf32>
    %22 = math.rsqrt %21 : vector<32x1xf32>
    %23 = vector.broadcast %22 : vector<32x1xf32> to vector<32x128xf32>
    %24 = arith.mulf %14, %23 : vector<32x128xf32>
    %25 = vector.broadcast %6 : vector<1x128xf32> to vector<32x128xf32>
    %26 = arith.mulf %24, %25 : vector<32x128xf32>
    %27 = vector.broadcast %8 : vector<1x128xf32> to vector<32x128xf32>
    %28 = arith.addf %26, %27 : vector<32x128xf32>
    %c0_13 = arith.constant 0 : index
    %c0_14 = arith.constant 0 : index
    %c0_15 = arith.constant 0 : index
    %29 = vector.load %arg5[%c0_13, %c0_14, %c0_15] : memref<1x128x128xf32, #tpu.memory_space<vmem>>, vector<1x128x128xf32>
    %30 = vector.shape_cast %29 : vector<1x128x128xf32> to vector<128x128xf32>
    %cst_16 = arith.constant dense<0.000000e+00> : vector<32x128xf32>
    %31 = tpu.matmul %28, %30, %cst_16 {dimension_numbers = #tpu.dot_dimension_numbers<[1], [0], [0], [1], [0, 0, 1, 1], [], []>} : vector<32x128xf32>, vector<128x128xf32>, vector<32x128xf32> -> vector<32x128xf32>
    %c0_17 = arith.constant 0 : index
    %c0_18 = arith.constant 0 : index
    %c0_19 = arith.constant 0 : index
    %32 = vector.load %arg6[%c0_17, %c0_18, %c0_19] : memref<1x1x128xf32, #tpu.memory_space<vmem>>, vector<1x1x128xf32>
    %33 = vector.shape_cast %32 : vector<1x1x128xf32> to vector<1x128xf32>
    %34 = vector.broadcast %33 : vector<1x128xf32> to vector<32x128xf32>
    %35 = arith.addf %31, %34 : vector<32x128xf32>
    %c0_20 = arith.constant 0 : index
    %c0_21 = arith.constant 0 : index
    %c0_22 = arith.constant 0 : index
    %36 = vector.load %arg7[%c0_20, %c0_21, %c0_22] : memref<1x128x128xf32, #tpu.memory_space<vmem>>, vector<1x128x128xf32>
    %37 = vector.shape_cast %36 : vector<1x128x128xf32> to vector<128x128xf32>
    %cst_23 = arith.constant dense<0.000000e+00> : vector<32x128xf32>
    %38 = tpu.matmul %28, %37, %cst_23 {dimension_numbers = #tpu.dot_dimension_numbers<[1], [0], [0], [1], [0, 0, 1, 1], [], []>} : vector<32x128xf32>, vector<128x128xf32>, vector<32x128xf32> -> vector<32x128xf32>
    %c0_24 = arith.constant 0 : index
    %c0_25 = arith.constant 0 : index
    %c0_26 = arith.constant 0 : index
    %39 = vector.load %arg8[%c0_24, %c0_25, %c0_26] : memref<1x1x128xf32, #tpu.memory_space<vmem>>, vector<1x1x128xf32>
    %40 = vector.shape_cast %39 : vector<1x1x128xf32> to vector<1x128xf32>
    %41 = vector.broadcast %40 : vector<1x128xf32> to vector<32x128xf32>
    %42 = arith.addf %38, %41 : vector<32x128xf32>
    %cst_27 = arith.constant 5.000000e-01 : f32
    %43 = vector.broadcast %cst_27 : f32 to vector<32x128xf32>
    %44 = arith.mulf %43, %35 : vector<32x128xf32>
    %cst_28 = arith.constant 0.707106769 : f32
    %45 = vector.broadcast %cst_28 : f32 to vector<32x128xf32>
    %46 = arith.mulf %35, %45 : vector<32x128xf32>
    %47 = math.erf %46 : vector<32x128xf32>
    %cst_29 = arith.constant 1.000000e+00 : f32
    %48 = vector.broadcast %cst_29 : f32 to vector<32x128xf32>
    %49 = arith.addf %48, %47 : vector<32x128xf32>
    %50 = arith.mulf %44, %49 : vector<32x128xf32>
    %cst_30 = arith.constant 5.000000e-01 : f32
    %51 = vector.broadcast %cst_30 : f32 to vector<32x128xf32>
    %52 = arith.mulf %51, %42 : vector<32x128xf32>
    %cst_31 = arith.constant 0.707106769 : f32
    %53 = vector.broadcast %cst_31 : f32 to vector<32x128xf32>
    %54 = arith.mulf %42, %53 : vector<32x128xf32>
    %55 = math.erf %54 : vector<32x128xf32>
    %cst_32 = arith.constant 1.000000e+00 : f32
    %56 = vector.broadcast %cst_32 : f32 to vector<32x128xf32>
    %57 = arith.addf %56, %55 : vector<32x128xf32>
    %58 = arith.mulf %52, %57 : vector<32x128xf32>
    %c0_33 = arith.constant 0 : index
    %c0_34 = arith.constant 0 : index
    %c0_35 = arith.constant 0 : index
    %59 = vector.load %arg9[%c0_33, %c0_34, %c0_35] : memref<1x1x128xf32, #tpu.memory_space<vmem>>, vector<1x1x128xf32>
    %60 = vector.shape_cast %59 : vector<1x1x128xf32> to vector<1x128xf32>
    %c0_36 = arith.constant 0 : index
    %c0_37 = arith.constant 0 : index
    %c0_38 = arith.constant 0 : index
    %61 = vector.load %arg10[%c0_36, %c0_37, %c0_38] : memref<1x1x128xf32, #tpu.memory_space<vmem>>, vector<1x1x128xf32>
    %62 = vector.shape_cast %61 : vector<1x1x128xf32> to vector<1x128xf32>
    %cst_39 = arith.constant dense<0.000000e+00> : vector<32xf32>
    %63 = vector.multi_reduction <add>, %58, %cst_39 [1] : vector<32x128xf32> to vector<32xf32>
    %64 = vector.shape_cast %63 : vector<32xf32> to vector<32x1xf32>
    %cst_40 = arith.constant 1.280000e+02 : f32
    %65 = vector.broadcast %cst_40 : f32 to vector<32x1xf32>
    %66 = arith.divf %64, %65 : vector<32x1xf32>
    %67 = vector.broadcast %66 : vector<32x1xf32> to vector<32x128xf32>
    %68 = arith.subf %58, %67 : vector<32x128xf32>
    %69 = arith.mulf %68, %68 : vector<32x128xf32>
    %cst_41 = arith.constant dense<0.000000e+00> : vector<32xf32>
    %70 = vector.multi_reduction <add>, %69, %cst_41 [1] : vector<32x128xf32> to vector<32xf32>
    %71 = vector.shape_cast %70 : vector<32xf32> to vector<32x1xf32>
    %cst_42 = arith.constant 1.280000e+02 : f32
    %72 = vector.broadcast %cst_42 : f32 to vector<32x1xf32>
    %73 = arith.divf %71, %72 : vector<32x1xf32>
    %cst_43 = arith.constant 9.99999974E-6 : f32
    %74 = vector.broadcast %cst_43 : f32 to vector<32x1xf32>
    %75 = arith.addf %73, %74 : vector<32x1xf32>
    %76 = math.rsqrt %75 : vector<32x1xf32>
    %77 = vector.broadcast %76 : vector<32x1xf32> to vector<32x128xf32>
    %78 = arith.mulf %68, %77 : vector<32x128xf32>
    %79 = vector.broadcast %60 : vector<1x128xf32> to vector<32x128xf32>
    %80 = arith.mulf %78, %79 : vector<32x128xf32>
    %81 = vector.broadcast %62 : vector<1x128xf32> to vector<32x128xf32>
    %82 = arith.addf %80, %81 : vector<32x128xf32>
    %c0_44 = arith.constant 0 : index
    %c0_45 = arith.constant 0 : index
    %c0_46 = arith.constant 0 : index
    %83 = vector.load %arg11[%c0_44, %c0_45, %c0_46] : memref<1x16x16xf32, #tpu.memory_space<vmem>>, vector<1x16x16xf32>
    %84 = vector.shape_cast %83 : vector<1x16x16xf32> to vector<16x16xf32>
    %c0_47 = arith.constant 0 : index
    %c0_48 = arith.constant 0 : index
    %c0_49 = arith.constant 0 : index
    %85 = vector.load %arg12[%c0_47, %c0_48, %c0_49] : memref<1x16x1xf32, #tpu.memory_space<vmem>>, vector<1x16x1xf32>
    %86 = vector.shape_cast %85 : vector<1x16x1xf32> to vector<16x1xf32>
    %87 = vector.shape_cast %86 : vector<16x1xf32> to vector<16x1xf32>
    %88 = vector.broadcast %87 : vector<16x1xf32> to vector<16x128xf32>
    %89 = vector.extract_strided_slice %82 {offsets = [0, 0], sizes = [16, 128], strides = [1, 1]} : vector<32x128xf32> to vector<16x128xf32>
    %cst_50 = arith.constant dense<0.000000e+00> : vector<16x128xf32>
    %90 = tpu.matmul %84, %89, %cst_50 {dimension_numbers = #tpu.dot_dimension_numbers<[1], [0], [0], [1], [0, 0, 1, 1], [], []>} : vector<16x16xf32>, vector<16x128xf32>, vector<16x128xf32> -> vector<16x128xf32>
    %91 = arith.addf %90, %88 : vector<16x128xf32>
    %92 = vector.extract_strided_slice %50 {offsets = [0, 0], sizes = [16, 128], strides = [1, 1]} : vector<32x128xf32> to vector<16x128xf32>
    %93 = arith.mulf %92, %91 : vector<16x128xf32>
    %94 = vector.extract_strided_slice %82 {offsets = [16, 0], sizes = [16, 128], strides = [1, 1]} : vector<32x128xf32> to vector<16x128xf32>
    %cst_51 = arith.constant dense<0.000000e+00> : vector<16x128xf32>
    %95 = tpu.matmul %84, %94, %cst_51 {dimension_numbers = #tpu.dot_dimension_numbers<[1], [0], [0], [1], [0, 0, 1, 1], [], []>} : vector<16x16xf32>, vector<16x128xf32>, vector<16x128xf32> -> vector<16x128xf32>
    %96 = arith.addf %95, %88 : vector<16x128xf32>
    %97 = vector.extract_strided_slice %50 {offsets = [16, 0], sizes = [16, 128], strides = [1, 1]} : vector<32x128xf32> to vector<16x128xf32>
    %98 = arith.mulf %97, %96 : vector<16x128xf32>
    %99 = tpu.concatenate %93, %98 in 0 : vector<16x128xf32>, vector<16x128xf32> -> vector<32x128xf32>
    %c0_52 = arith.constant 0 : index
    %c0_53 = arith.constant 0 : index
    %c0_54 = arith.constant 0 : index
    %100 = vector.load %arg13[%c0_52, %c0_53, %c0_54] : memref<1x128x128xf32, #tpu.memory_space<vmem>>, vector<1x128x128xf32>
    %101 = vector.shape_cast %100 : vector<1x128x128xf32> to vector<128x128xf32>
    %cst_55 = arith.constant dense<0.000000e+00> : vector<32x128xf32>
    %102 = tpu.matmul %99, %101, %cst_55 {dimension_numbers = #tpu.dot_dimension_numbers<[1], [0], [0], [1], [0, 0, 1, 1], [], []>} : vector<32x128xf32>, vector<128x128xf32>, vector<32x128xf32> -> vector<32x128xf32>
    %c0_56 = arith.constant 0 : index
    %c0_57 = arith.constant 0 : index
    %c0_58 = arith.constant 0 : index
    %103 = vector.load %arg14[%c0_56, %c0_57, %c0_58] : memref<1x1x128xf32, #tpu.memory_space<vmem>>, vector<1x1x128xf32>
    %104 = vector.shape_cast %103 : vector<1x1x128xf32> to vector<1x128xf32>
    %105 = vector.broadcast %104 : vector<1x128xf32> to vector<32x128xf32>
    %106 = arith.addf %102, %105 : vector<32x128xf32>
    %107 = arith.addf %106, %4 : vector<32x128xf32>
    %108 = vector.shape_cast %107 : vector<32x128xf32> to vector<2x16x128xf32>
    %c0_59 = arith.constant 0 : index
    %c0_60 = arith.constant 0 : index
    %c0_61 = arith.constant 0 : index
    %109 = vector.load %arg15[%c0_59, %c0_60, %c0_61] : memref<2x16x128xf32, #tpu.memory_space<vmem>>, vector<2x16x128xf32>
    tpu.vector_store %arg15[%c0_59, %c0_60, %c0_61], %108 {strides = array<i32>} : memref<2x16x128xf32, #tpu.memory_space<vmem>>, vector<2x16x128xf32>,
    return
  }
  func.func @transform_0(%arg0: i32, %arg1: i32) -> (i32, i32, i32) {
    %c0_i32 = arith.constant 0 : i32
    %c0_i32_0 = arith.constant 0 : i32
    %c0_i32_1 = arith.constant 0 : i32
    return %arg0, %c0_i32, %c0_i32_0 : i32, i32, i32
  }
  func.func @transform_1(%arg0: i32, %arg1: i32) -> (i32, i32, i32) {
    %c0_i32 = arith.constant 0 : i32
    %c0_i32_0 = arith.constant 0 : i32
    %c0_i32_1 = arith.constant 0 : i32
    return %arg1, %c0_i32, %c0_i32_0 : i32, i32, i32
  }
  func.func @transform_2(%arg0: i32, %arg1: i32) -> (i32, i32, i32) {
    %c0_i32 = arith.constant 0 : i32
    %c0_i32_0 = arith.constant 0 : i32
    %c0_i32_1 = arith.constant 0 : i32
    return %arg1, %c0_i32, %c0_i32_0 : i32, i32, i32
  }
  func.func @transform_3(%arg0: i32, %arg1: i32) -> (i32, i32, i32) {
    %c0_i32 = arith.constant 0 : i32
    %c0_i32_0 = arith.constant 0 : i32
    %c0_i32_1 = arith.constant 0 : i32
    return %arg1, %c0_i32, %c0_i32_0 : i32, i32, i32
  }
  func.func @transform_4(%arg0: i32, %arg1: i32) -> (i32, i32, i32) {
    %c0_i32 = arith.constant 0 : i32
    %c0_i32_0 = arith.constant 0 : i32
    %c0_i32_1 = arith.constant 0 : i32
    return %arg1, %c0_i32, %c0_i32_0 : i32, i32, i32
  }
  func.func @transform_5(%arg0: i32, %arg1: i32) -> (i32, i32, i32) {
    %c0_i32 = arith.constant 0 : i32
    %c0_i32_0 = arith.constant 0 : i32
    %c0_i32_1 = arith.constant 0 : i32
    return %arg1, %c0_i32, %c0_i32_0 : i32, i32, i32
  }
  func.func @transform_6(%arg0: i32, %arg1: i32) -> (i32, i32, i32) {
    %c0_i32 = arith.constant 0 : i32
    %c0_i32_0 = arith.constant 0 : i32
    %c0_i32_1 = arith.constant 0 : i32
    return %arg1, %c0_i32, %c0_i32_0 : i32, i32, i32
  }
  func.func @transform_7(%arg0: i32, %arg1: i32) -> (i32, i32, i32) {
    %c0_i32 = arith.constant 0 : i32
    %c0_i32_0 = arith.constant 0 : i32
    %c0_i32_1 = arith.constant 0 : i32
    return %arg1, %c0_i32, %c0_i32_0 : i32, i32, i32
  }
  func.func @transform_8(%arg0: i32, %arg1: i32) -> (i32, i32, i32) {
    %c0_i32 = arith.constant 0 : i32
    %c0_i32_0 = arith.constant 0 : i32
    %c0_i32_1 = arith.constant 0 : i32
    return %arg1, %c0_i32, %c0_i32_0 : i32, i32, i32
  }
  func.func @transform_9(%arg0: i32, %arg1: i32) -> (i32, i32, i32) {
    %c0_i32 = arith.constant 0 : i32
    %c0_i32_0 = arith.constant 0 : i32
    %c0_i32_1 = arith.constant 0 : i32
    return %arg1, %c0_i32, %c0_i32_0 : i32, i32, i32
  }
  func.func @transform_10(%arg0: i32, %arg1: i32) -> (i32, i32, i32) {
    %c0_i32 = arith.constant 0 : i32
    %c0_i32_0 = arith.constant 0 : i32
    %c0_i32_1 = arith.constant 0 : i32
    return %arg1, %c0_i32, %c0_i32_0 : i32, i32, i32
  }
  func.func @transform_11(%arg0: i32, %arg1: i32) -> (i32, i32, i32) {
    %c0_i32 = arith.constant 0 : i32
    %c0_i32_0 = arith.constant 0 : i32
    %c0_i32_1 = arith.constant 0 : i32
    return %arg1, %c0_i32, %c0_i32_0 : i32, i32, i32
  }
  func.func @transform_12(%arg0: i32, %arg1: i32) -> (i32, i32, i32) {
    %c0_i32 = arith.constant 0 : i32
    %c0_i32_0 = arith.constant 0 : i32
    %c0_i32_1 = arith.constant 0 : i32
    return %arg1, %c0_i32, %c0_i32_0 : i32, i32, i32
  }
  func.func @transform_13(%arg0: i32, %arg1: i32) -> (i32, i32, i32) {
    %c0_i32 = arith.constant 0 : i32
    %c0_i32_0 = arith.constant 0 : i32
    %c0_i32_1 = arith.constant 0 : i32
    return %arg0, %c0_i32, %c0_i32_0 : i32, i32, i32
  }
}

</mosaic_0001>

<llo_original>
// kernel: tpu_custom_call.1
$region0: #{tpu_custom_call.1}
  #allocation0 [shape = 'u32[]', space=smem, size = 0x4, offset = 0x4, fixed_abs, tag = 'smem constant byte address 0x4 - core index']
  #allocation1 [shape = 'u32[144,128]{1,0:T(1,128)}', space=vmem, size = 0x12000, scoped, tag = 'internal scratch']
  %s0 = inlined_call_operand.hbm [shape: f32[4,16,128], index: 0, kind: input, shape index: {}]
  %s1 = inlined_call_operand.vmem [shape: f32[3,1,128], index: 1, kind: input, shape index: {}]
  %s2 = inlined_call_operand.vmem [shape: f32[3,1,128], index: 2, kind: input, shape index: {}]
  %s3 = inlined_call_operand.hbm [shape: f32[3,128,128], index: 3, kind: input, shape index: {}]
  %s4 = inlined_call_operand.vmem [shape: f32[3,1,128], index: 4, kind: input, shape index: {}]
  %s5 = inlined_call_operand.hbm [shape: f32[3,128,128], index: 5, kind: input, shape index: {}]
  %s6 = inlined_call_operand.vmem [shape: f32[3,1,128], index: 6, kind: input, shape index: {}]
  %s7 = inlined_call_operand.vmem [shape: f32[3,1,128], index: 7, kind: input, shape index: {}]
  %s8 = inlined_call_operand.vmem [shape: f32[3,1,128], index: 8, kind: input, shape index: {}]
  %s9 = inlined_call_operand.vmem [shape: f32[3,16,16], index: 9, kind: input, shape index: {}]
  %s10 = inlined_call_operand.vmem [shape: f32[3,16,1], index: 10, kind: input, shape index: {}]
  %s11 = inlined_call_operand.hbm [shape: f32[3,128,128], index: 11, kind: input, shape index: {}]
  %s12 = inlined_call_operand.vmem [shape: f32[3,1,128], index: 12, kind: input, shape index: {}]
  %s13 = inlined_call_operand.hbm [shape: f32[4,16,128], index: 13, kind: output, shape index: {}]
  %s14 = sld [smem:[#allocation0]]
  $region105: #{tpu_custom_call.1} parent=0
    _
  %s16 = ssub.s32 1, %s14
  %s17 = scalar_select 0, %s16, %s14
  $region1: #{tpu_custom_call.1} parent=0
    #allocation2 [shape = 'u8[32768]{0}', space=vmem, size = 0x8000, scoped, tag = 'input window, operand 0']
    #allocation3 [shape = 's32[2]{0}', space=sflag, size = 0x8, scoped, tag = 'scoped memory for tpu_custom_call.1']
    #allocation4 [shape = 's32[2]{0}', space=sflag, size = 0x8, scoped, tag = 'scoped memory for tpu_custom_call.1']
    #allocation5 [shape = 'u8[131072]{0}', space=vmem, size = 0x20000, scoped, tag = 'input window, operand 3']
    #allocation6 [shape = 's32[2]{0}', space=sflag, size = 0x8, scoped, tag = 'scoped memory for tpu_custom_call.1']
    #allocation7 [shape = 'u8[131072]{0}', space=vmem, size = 0x20000, scoped, tag = 'input window, operand 5']
    #allocation8 [shape = 'u8[131072]{0}', space=vmem, size = 0x20000, scoped, tag = 'input window, operand 11']
    #allocation9 [shape = 's32[2]{0}', space=sflag, size = 0x8, scoped, tag = 'scoped memory for tpu_custom_call.1']
    #allocation10 [shape = 'u8[32768]{0}', space=vmem, size = 0x8000, scoped, tag = 'output window, operand 0']
    %18 = vsyncpa [#allocation3], 0
    %s19 = scalar_lea.sflag [#allocation3], 1
    %20 = vsyncpa %s19, 0
    %21 = vsyncpa [#allocation6], 0
    %s22 = scalar_lea.sflag [#allocation6], 1
    %23 = vsyncpa %s22, 0
    %24 = vsyncpa [#allocation9], 0
    %s25 = scalar_lea.sflag [#allocation9], 1
    %26 = vsyncpa %s25, 0
    %27 = vsyncpa [#allocation4], 0
    %s28 = scalar_lea.sflag [#allocation4], 1
    %29 = vsyncpa %s28, 0
    loop: start=0, step=1, limit=8
    $region2: #{tpu_custom_call.1} parent=1 // loop_pre_header
      _
    $region3: #{tpu_custom_call.1} parent=1 // loop_header
      %s31 = sphi 0, %s35
      %p32 = scmp.ge.s32.totalorder %s31, 8
      %s38 = sphi 0, %s50
      %s39 = sphi 0, %s46
      %s40 = sphi 0, %s38
      %s41 = sphi 0, %s39
      %s42 = sphi 0, %s40
      %s43 = sphi 0, %s41
      %s53 = sphi 0, %s55
      %s56 = sphi 0, %s53
      %s57 = sphi 0, %s56
      %s73 = sphi 0, %s57
      %s79 = sphi 0, %s81
      %s82 = sphi 0, %s79
      %s83 = sphi 0, %s82
      %s99 = sphi 0, %s83
      %s105 = sphi 0, %s107
      %s108 = sphi 0, %s105
      %s109 = sphi 0, %s108
      %s125 = sphi 0, %s109
      %s131 = sphi 0, %s133
      %s134 = sphi 0, %s131
      %s135 = sphi 0, %s134
      %s151 = sphi 0, %s135
      %s157 = sphi 0, %s159
      %s160 = sphi 0, %s157
      %s161 = sphi 0, %s160
      %s177 = sphi 0, %s161
      %s183 = sphi 0, %s185
      %s186 = sphi 0, %s183
      %s187 = sphi 0, %s186
      %s203 = sphi 0, %s187
      %s209 = sphi 0, %s211
      %s212 = sphi 0, %s209
      %s213 = sphi 0, %s212
      %s229 = sphi 0, %s213
      %s235 = sphi 0, %s237
      %s238 = sphi 0, %s235
      %s239 = sphi 0, %s238
      %s255 = sphi 0, %s239
      %s261 = sphi 0, %s263
      %s264 = sphi 0, %s261
      %s265 = sphi 0, %s264
      %s281 = sphi 0, %s265
      %s287 = sphi 0, %s289
      %s290 = sphi 0, %s287
      %s291 = sphi 0, %s290
      %s307 = sphi 0, %s291
      %s313 = sphi 0, %s315
      %s316 = sphi 0, %s313
      %s317 = sphi 0, %s316
      %s333 = sphi 0, %s317
      %s339 = sphi 0, %s341
      %s342 = sphi 0, %s339
      %s343 = sphi 0, %s342
      %s359 = sphi 0, %s343
      %s365 = sphi 0, %s367
      %s368 = sphi 0, %s365
      %s369 = sphi 0, %s368
      %s385 = sphi 0, %s369
      %s391 = sphi 0, %s393
      %s394 = sphi 0, %s391
      %s395 = sphi 0, %s394
      %s411 = sphi 0, %s395
    $region4: #{tpu_custom_call.1} parent=1 // loop_header_branch
      %34 = sbr.rel (%p32) target = $region8
    $region5: #{tpu_custom_call.1} parent=1 // loop_body
      %s36 = ssub.s32 %s31, 1
      %s37 = ssub.s32 %s31, 2
      %s44 = sadd.s32 1, %s39
      %p45 = scmp.ge.s32.totalorder %s44, 3
      %s46 = scalar_select %p45, 0, %s44
      %s47 = sadd.s32 1, %s38
      %s48 = scalar_select %p45, %s47, %s38
      %p49 = scmp.ge.s32.totalorder %s48, 2
      %s50 = scalar_select %p49, 0, %s48
      %s51 = ssub.s32 %s38, %s50
      %p52 = scmp.eq.s32.totalorder %s51, 0
      %s54 = sadd.s32 %s53, 1
      %s55 = scalar_select %p52, %s53, %s54
      %p58 = pneg %p52
      %p59 = scmp.eq.s32.totalorder %s31, 5
      %p60 = por %p58, %p59
      %p61 = scmp.ne.s32.totalorder %s53, %s56
      %p62 = scmp.eq.s32.totalorder %s31, 0
      %p63 = por %p61, %p62
      %p64 = scmp.ne.s32.totalorder %s53, %s56
      %p65 = scmp.eq.s32.totalorder %s36, 5
      %p66 = por %p64, %p65
      %p67 = scmp.ne.s32.totalorder %s56, %s57
      %p68 = scmp.eq.s32.totalorder %s36, 0
      %p69 = por %p67, %p68
      %p70 = scmp.ne.s32.totalorder %s56, %s57
      %p71 = scmp.eq.s32.totalorder %s37, 5
      %p72 = por %p70, %p71
      %p74 = scmp.ne.s32.totalorder %s57, %s73
      %p75 = scmp.eq.s32.totalorder %s37, 0
      %p76 = por %p74, %p75
      %s77 = ssub.s32 %s39, %s46
      %p78 = scmp.eq.s32.totalorder %s77, 0
      %s80 = sadd.s32 %s79, 1
      %s81 = scalar_select %p78, %s79, %s80
      %p84 = pneg %p78
      %p85 = scmp.eq.s32.totalorder %s31, 5
      %p86 = por %p84, %p85
      %p87 = scmp.ne.s32.totalorder %s79, %s82
      %p88 = scmp.eq.s32.totalorder %s31, 0
      %p89 = por %p87, %p88
      %p90 = scmp.ne.s32.totalorder %s79, %s82
      %p91 = scmp.eq.s32.totalorder %s36, 5
      %p92 = por %p90, %p91
      %p93 = scmp.ne.s32.totalorder %s82, %s83
      %p94 = scmp.eq.s32.totalorder %s36, 0
      %p95 = por %p93, %p94
      %p96 = scmp.ne.s32.totalorder %s82, %s83
      %p97 = scmp.eq.s32.totalorder %s37, 5
      %p98 = por %p96, %p97
      %p100 = scmp.ne.s32.totalorder %s83, %s99
      %p101 = scmp.eq.s32.totalorder %s37, 0
      %p102 = por %p100, %p101
      %s103 = ssub.s32 %s39, %s46
      %p104 = scmp.eq.s32.totalorder %s103, 0
      %s106 = sadd.s32 %s105, 1
      %s107 = scalar_select %p104, %s105, %s106
      %p110 = pneg %p104
      %p111 = scmp.eq.s32.totalorder %s31, 5
      %p112 = por %p110, %p111
      %p113 = scmp.ne.s32.totalorder %s105, %s108
      %p114 = scmp.eq.s32.totalorder %s31, 0
      %p115 = por %p113, %p114
      %p116 = scmp.ne.s32.totalorder %s105, %s108
      %p117 = scmp.eq.s32.totalorder %s36, 5
      %p118 = por %p116, %p117
      %p119 = scmp.ne.s32.totalorder %s108, %s109
      %p120 = scmp.eq.s32.totalorder %s36, 0
      %p121 = por %p119, %p120
      %p122 = scmp.ne.s32.totalorder %s108, %s109
      %p123 = scmp.eq.s32.totalorder %s37, 5
      %p124 = por %p122, %p123
      %p126 = scmp.ne.s32.totalorder %s109, %s125
      %p127 = scmp.eq.s32.totalorder %s37, 0
      %p128 = por %p126, %p127
      %s129 = ssub.s32 %s39, %s46
      %p130 = scmp.eq.s32.totalorder %s129, 0
      %s132 = sadd.s32 %s131, 1
      %s133 = scalar_select %p130, %s131, %s132
      %p136 = pneg %p130
      %p137 = scmp.eq.s32.totalorder %s31, 5
      %p138 = por %p136, %p137
      %p139 = scmp.ne.s32.totalorder %s131, %s134
      %p140 = scmp.eq.s32.totalorder %s31, 0
      %p141 = por %p139, %p140
      %p142 = scmp.ne.s32.totalorder %s131, %s134
      %p143 = scmp.eq.s32.totalorder %s36, 5
      %p144 = por %p142, %p143
      %p145 = scmp.ne.s32.totalorder %s134, %s135
      %p146 = scmp.eq.s32.totalorder %s36, 0
      %p147 = por %p145, %p146
      %p148 = scmp.ne.s32.totalorder %s134, %s135
      %p149 = scmp.eq.s32.totalorder %s37, 5
      %p150 = por %p148, %p149
      %p152 = scmp.ne.s32.totalorder %s135, %s151
      %p153 = scmp.eq.s32.totalorder %s37, 0
      %p154 = por %p152, %p153
      %s155 = ssub.s32 %s39, %s46
      %p156 = scmp.eq.s32.totalorder %s155, 0
      %s158 = sadd.s32 %s157, 1
      %s159 = scalar_select %p156, %s157, %s158
      %p162 = pneg %p156
      %p163 = scmp.eq.s32.totalorder %s31, 5
      %p164 = por %p162, %p163
      %p165 = scmp.ne.s32.totalorder %s157, %s160
      %p166 = scmp.eq.s32.totalorder %s31, 0
      %p167 = por %p165, %p166
      %p168 = scmp.ne.s32.totalorder %s157, %s160
      %p169 = scmp.eq.s32.totalorder %s36, 5
      %p170 = por %p168, %p169
      %p171 = scmp.ne.s32.totalorder %s160, %s161
      %p172 = scmp.eq.s32.totalorder %s36, 0
      %p173 = por %p171, %p172
      %p174 = scmp.ne.s32.totalorder %s160, %s161
      %p175 = scmp.eq.s32.totalorder %s37, 5
      %p176 = por %p174, %p175
      %p178 = scmp.ne.s32.totalorder %s161, %s177
      %p179 = scmp.eq.s32.totalorder %s37, 0
      %p180 = por %p178, %p179
      %s181 = ssub.s32 %s39, %s46
      %p182 = scmp.eq.s32.totalorder %s181, 0
      %s184 = sadd.s32 %s183, 1
      %s185 = scalar_select %p182, %s183, %s184
      %p188 = pneg %p182
      %p189 = scmp.eq.s32.totalorder %s31, 5
      %p190 = por %p188, %p189
      %p191 = scmp.ne.s32.totalorder %s183, %s186
      %p192 = scmp.eq.s32.totalorder %s31, 0
      %p193 = por %p191, %p192
      %p194 = scmp.ne.s32.totalorder %s183, %s186
      %p195 = scmp.eq.s32.totalorder %s36, 5
      %p196 = por %p194, %p195
      %p197 = scmp.ne.s32.totalorder %s186, %s187
      %p198 = scmp.eq.s32.totalorder %s36, 0
      %p199 = por %p197, %p198
      %p200 = scmp.ne.s32.totalorder %s186, %s187
      %p201 = scmp.eq.s32.totalorder %s37, 5
      %p202 = por %p200, %p201
      %p204 = scmp.ne.s32.totalorder %s187, %s203
      %p205 = scmp.eq.s32.totalorder %s37, 0
      %p206 = por %p204, %p205
      %s207 = ssub.s32 %s39, %s46
      %p208 = scmp.eq.s32.totalorder %s207, 0
      %s210 = sadd.s32 %s209, 1
      %s211 = scalar_select %p208, %s209, %s210
      %p214 = pneg %p208
      %p215 = scmp.eq.s32.totalorder %s31, 5
      %p216 = por %p214, %p215
      %p217 = scmp.ne.s32.totalorder %s209, %s212
      %p218 = scmp.eq.s32.totalorder %s31, 0
      %p219 = por %p217, %p218
      %p220 = scmp.ne.s32.totalorder %s209, %s212
      %p221 = scmp.eq.s32.totalorder %s36, 5
      %p222 = por %p220, %p221
      %p223 = scmp.ne.s32.totalorder %s212, %s213
      %p224 = scmp.eq.s32.totalorder %s36, 0
      %p225 = por %p223, %p224
      %p226 = scmp.ne.s32.totalorder %s212, %s213
      %p227 = scmp.eq.s32.totalorder %s37, 5
      %p228 = por %p226, %p227
      %p230 = scmp.ne.s32.totalorder %s213, %s229
      %p231 = scmp.eq.s32.totalorder %s37, 0
      %p232 = por %p230, %p231
      %s233 = ssub.s32 %s39, %s46
      %p234 = scmp.eq.s32.totalorder %s233, 0
      %s236 = sadd.s32 %s235, 1
      %s237 = scalar_select %p234, %s235, %s236
      %p240 = pneg %p234
      %p241 = scmp.eq.s32.totalorder %s31, 5
      %p242 = por %p240, %p241
      %p243 = scmp.ne.s32.totalorder %s235, %s238
      %p244 = scmp.eq.s32.totalorder %s31, 0
      %p245 = por %p243, %p244
      %p246 = scmp.ne.s32.totalorder %s235, %s238
      %p247 = scmp.eq.s32.totalorder %s36, 5
      %p248 = por %p246, %p247
      %p249 = scmp.ne.s32.totalorder %s238, %s239
      %p250 = scmp.eq.s32.totalorder %s36, 0
      %p251 = por %p249, %p250
      %p252 = scmp.ne.s32.totalorder %s238, %s239
      %p253 = scmp.eq.s32.totalorder %s37, 5
      %p254 = por %p252, %p253
      %p256 = scmp.ne.s32.totalorder %s239, %s255
      %p257 = scmp.eq.s32.totalorder %s37, 0
      %p258 = por %p256, %p257
      %s259 = ssub.s32 %s39, %s46
      %p260 = scmp.eq.s32.totalorder %s259, 0
      %s262 = sadd.s32 %s261, 1
      %s263 = scalar_select %p260, %s261, %s262
      %p266 = pneg %p260
      %p267 = scmp.eq.s32.totalorder %s31, 5
      %p268 = por %p266, %p267
      %p269 = scmp.ne.s32.totalorder %s261, %s264
      %p270 = scmp.eq.s32.totalorder %s31, 0
      %p271 = por %p269, %p270
      %p272 = scmp.ne.s32.totalorder %s261, %s264
      %p273 = scmp.eq.s32.totalorder %s36, 5
      %p274 = por %p272, %p273
      %p275 = scmp.ne.s32.totalorder %s264, %s265
      %p276 = scmp.eq.s32.totalorder %s36, 0
      %p277 = por %p275, %p276
      %p278 = scmp.ne.s32.totalorder %s264, %s265
      %p279 = scmp.eq.s32.totalorder %s37, 5
      %p280 = por %p278, %p279
      %p282 = scmp.ne.s32.totalorder %s265, %s281
      %p283 = scmp.eq.s32.totalorder %s37, 0
      %p284 = por %p282, %p283
      %s285 = ssub.s32 %s39, %s46
      %p286 = scmp.eq.s32.totalorder %s285, 0
      %s288 = sadd.s32 %s287, 1
      %s289 = scalar_select %p286, %s287, %s288
      %p292 = pneg %p286
      %p293 = scmp.eq.s32.totalorder %s31, 5
      %p294 = por %p292, %p293
      %p295 = scmp.ne.s32.totalorder %s287, %s290
      %p296 = scmp.eq.s32.totalorder %s31, 0
      %p297 = por %p295, %p296
      %p298 = scmp.ne.s32.totalorder %s287, %s290
      %p299 = scmp.eq.s32.totalorder %s36, 5
      %p300 = por %p298, %p299
      %p301 = scmp.ne.s32.totalorder %s290, %s291
      %p302 = scmp.eq.s32.totalorder %s36, 0
      %p303 = por %p301, %p302
      %p304 = scmp.ne.s32.totalorder %s290, %s291
      %p305 = scmp.eq.s32.totalorder %s37, 5
      %p306 = por %p304, %p305
      %p308 = scmp.ne.s32.totalorder %s291, %s307
      %p309 = scmp.eq.s32.totalorder %s37, 0
      %p310 = por %p308, %p309
      %s311 = ssub.s32 %s39, %s46
      %p312 = scmp.eq.s32.totalorder %s311, 0
      %s314 = sadd.s32 %s313, 1
      %s315 = scalar_select %p312, %s313, %s314
      %p318 = pneg %p312
      %p319 = scmp.eq.s32.totalorder %s31, 5
      %p320 = por %p318, %p319
      %p321 = scmp.ne.s32.totalorder %s313, %s316
      %p322 = scmp.eq.s32.totalorder %s31, 0
      %p323 = por %p321, %p322
      %p324 = scmp.ne.s32.totalorder %s313, %s316
      %p325 = scmp.eq.s32.totalorder %s36, 5
      %p326 = por %p324, %p325
      %p327 = scmp.ne.s32.totalorder %s316, %s317
      %p328 = scmp.eq.s32.totalorder %s36, 0
      %p329 = por %p327, %p328
      %p330 = scmp.ne.s32.totalorder %s316, %s317
      %p331 = scmp.eq.s32.totalorder %s37, 5
      %p332 = por %p330, %p331
      %p334 = scmp.ne.s32.totalorder %s317, %s333
      %p335 = scmp.eq.s32.totalorder %s37, 0
      %p336 = por %p334, %p335
      %s337 = ssub.s32 %s39, %s46
      %p338 = scmp.eq.s32.totalorder %s337, 0
      %s340 = sadd.s32 %s339, 1
      %s341 = scalar_select %p338, %s339, %s340
      %p344 = pneg %p338
      %p345 = scmp.eq.s32.totalorder %s31, 5
      %p346 = por %p344, %p345
      %p347 = scmp.ne.s32.totalorder %s339, %s342
      %p348 = scmp.eq.s32.totalorder %s31, 0
      %p349 = por %p347, %p348
      %p350 = scmp.ne.s32.totalorder %s339, %s342
      %p351 = scmp.eq.s32.totalorder %s36, 5
      %p352 = por %p350, %p351
      %p353 = scmp.ne.s32.totalorder %s342, %s343
      %p354 = scmp.eq.s32.totalorder %s36, 0
      %p355 = por %p353, %p354
      %p356 = scmp.ne.s32.totalorder %s342, %s343
      %p357 = scmp.eq.s32.totalorder %s37, 5
      %p358 = por %p356, %p357
      %p360 = scmp.ne.s32.totalorder %s343, %s359
      %p361 = scmp.eq.s32.totalorder %s37, 0
      %p362 = por %p360, %p361
      %s363 = ssub.s32 %s39, %s46
      %p364 = scmp.eq.s32.totalorder %s363, 0
      %s366 = sadd.s32 %s365, 1
      %s367 = scalar_select %p364, %s365, %s366
      %p370 = pneg %p364
      %p371 = scmp.eq.s32.totalorder %s31, 5
      %p372 = por %p370, %p371
      %p373 = scmp.ne.s32.totalorder %s365, %s368
      %p374 = scmp.eq.s32.totalorder %s31, 0
      %p375 = por %p373, %p374
      %p376 = scmp.ne.s32.totalorder %s365, %s368
      %p377 = scmp.eq.s32.totalorder %s36, 5
      %p378 = por %p376, %p377
      %p379 = scmp.ne.s32.totalorder %s368, %s369
      %p380 = scmp.eq.s32.totalorder %s36, 0
      %p381 = por %p379, %p380
      %p382 = scmp.ne.s32.totalorder %s368, %s369
      %p383 = scmp.eq.s32.totalorder %s37, 5
      %p384 = por %p382, %p383
      %p386 = scmp.ne.s32.totalorder %s369, %s385
      %p387 = scmp.eq.s32.totalorder %s37, 0
      %p388 = por %p386, %p387
      %s389 = ssub.s32 %s38, %s50
      %p390 = scmp.eq.s32.totalorder %s389, 0
      %s392 = sadd.s32 %s391, 1
      %s393 = scalar_select %p390, %s391, %s392
      %p396 = pneg %p390
      %p397 = scmp.eq.s32.totalorder %s31, 5
      %p398 = por %p396, %p397
      %p399 = scmp.ne.s32.totalorder %s391, %s394
      %p400 = scmp.eq.s32.totalorder %s31, 0
      %p401 = por %p399, %p400
      %p402 = scmp.ne.s32.totalorder %s391, %s394
      %p403 = scmp.eq.s32.totalorder %s36, 5
      %p404 = por %p402, %p403
      %p405 = scmp.ne.s32.totalorder %s394, %s395
      %p406 = scmp.eq.s32.totalorder %s36, 0
      %p407 = por %p405, %p406
      %p408 = scmp.ne.s32.totalorder %s394, %s395
      %p409 = scmp.eq.s32.totalorder %s37, 5
      %p410 = por %p408, %p409
      %p412 = scmp.ne.s32.totalorder %s395, %s411
      %p413 = scmp.eq.s32.totalorder %s37, 0
      %p414 = por %p412, %p413
      %p415 = scmp.le.s32.totalorder 1, %s31
      %p416 = scmp.lt.s32.totalorder %s31, 7
      %p417 = pnand %p415, %p416
      %p418 = pneg %p417
      // Predicated region
      $region9: #{tpu_custom_call.1} parent=5 // pred_check
        _
      $region10: #{tpu_custom_call.1} parent=5 // pred_check_branch
        %420 = sbr.rel (%p417) target = $region12
      $region11: #{tpu_custom_call.1} parent=5 // pred_region
        %s421 = ssub.s32 %s31, 1
      $region12: #{tpu_custom_call.1} parent=5 // pred_fallthru
        _
      %p422 = scmp.lt.s32.totalorder %s31, 6
      // Predicated region
      $region13: #{tpu_custom_call.1} parent=5 // pred_check
        %p423 = pneg %p422
      $region14: #{tpu_custom_call.1} parent=5 // pred_check_branch
        %425 = sbr.rel (%p423) target = $region16
      $region15: #{tpu_custom_call.1} parent=5 // pred_region
        // Predicated region
        $region17: #{tpu_custom_call.1} parent=15 // pred_check
          %p426 = pneg %p63
        $region18: #{tpu_custom_call.1} parent=15 // pred_check_branch
          %428 = sbr.rel (%p426) target = $region20
        $region19: #{tpu_custom_call.1} parent=15 // pred_region
          %s429 = sand.u32 %s53, 1
          %s430 = scalar_lea.sflag [#allocation3], %s429
          %s431 = sand.u32 %s53, 1
          %s432 = smul.addr %s431, 32
          %s433 = scalar_lea.vmem [#allocation2], %s432
          %s434 = smul.u32 2, %s38
          %s436 = ssub.s32 512, 512
          %437 = vsyncadd %s430, %s436
          %s438 = smul.addr %s434, 2
          %s439 = smul.addr %s438, 128
          %s440 = scalar_lea.hbm %s0, %s439
          %s441 = sshll.u32 %s433, 4
          %s442 = int_to_ptr.vmem [resolvable:$true] %s441
          %447 = dma.hbm_to_vmem [thread:$0]  %s440, 512, %s442, %s430, 128, 128, 8
        $region20: #{tpu_custom_call.1} parent=15 // pred_fallthru
          _
        // Predicated region
        $region21: #{tpu_custom_call.1} parent=15 // pred_check
          %p448 = pneg %p89
        $region22: #{tpu_custom_call.1} parent=15 // pred_check_branch
          %450 = sbr.rel (%p448) target = $region24
        $region23: #{tpu_custom_call.1} parent=15 // pred_region
          %p451 = scmp.lt.s32.totalorder %s39, 2
          %s452 = scalar_select %p451, %s39, 2
          %s453 = scalar_lea.vmem %s1, %s452
        $region24: #{tpu_custom_call.1} parent=15 // pred_fallthru
          _
        // Predicated region
        $region25: #{tpu_custom_call.1} parent=15 // pred_check
          %p454 = pneg %p115
        $region26: #{tpu_custom_call.1} parent=15 // pred_check_branch
          %456 = sbr.rel (%p454) target = $region28
        $region27: #{tpu_custom_call.1} parent=15 // pred_region
          %p457 = scmp.lt.s32.totalorder %s39, 2
          %s458 = scalar_select %p457, %s39, 2
          %s459 = scalar_lea.vmem %s2, %s458
        $region28: #{tpu_custom_call.1} parent=15 // pred_fallthru
          _
        // Predicated region
        $region29: #{tpu_custom_call.1} parent=15 // pred_check
          %p460 = pneg %p141
        $region30: #{tpu_custom_call.1} parent=15 // pred_check_branch
          %462 = sbr.rel (%p460) target = $region32
        $region31: #{tpu_custom_call.1} parent=15 // pred_region
          %s463 = sand.u32 %s31, 1
          %s464 = scalar_lea.sflag [#allocation6], %s463
          %s465 = sand.u32 %s131, 1
          %s466 = smul.addr %s465, 128
          %s467 = scalar_lea.vmem [#allocation5], %s466
          %s469 = ssub.s32 2048, 2048
          %470 = vsyncadd %s464, %s469
          %s471 = smul.addr %s39, 16
          %s472 = smul.addr %s471, 128
          %s473 = scalar_lea.hbm %s3, %s472
          %s474 = sshll.u32 %s467, 4
          %s475 = int_to_ptr.vmem [resolvable:$true] %s474
          %480 = dma.hbm_to_vmem [thread:$0]  %s473, 2048, %s475, %s464, 128, 128, 8
        $region32: #{tpu_custom_call.1} parent=15 // pred_fallthru
          _
        // Predicated region
        $region33: #{tpu_custom_call.1} parent=15 // pred_check
          %p481 = pneg %p167
        $region34: #{tpu_custom_call.1} parent=15 // pred_check_branch
          %483 = sbr.rel (%p481) target = $region36
        $region35: #{tpu_custom_call.1} parent=15 // pred_region
          %p484 = scmp.lt.s32.totalorder %s39, 2
          %s485 = scalar_select %p484, %s39, 2
          %s486 = scalar_lea.vmem %s4, %s485
        $region36: #{tpu_custom_call.1} parent=15 // pred_fallthru
          _
        // Predicated region
        $region37: #{tpu_custom_call.1} parent=15 // pred_check
          %p487 = pneg %p193
        $region38: #{tpu_custom_call.1} parent=15 // pred_check_branch
          %489 = sbr.rel (%p487) target = $region40
        $region39: #{tpu_custom_call.1} parent=15 // pred_region
          %s490 = sand.u32 %s31, 1
          %s491 = scalar_lea.sflag [#allocation6], %s490
          %s492 = sand.u32 %s183, 1
          %s493 = smul.addr %s492, 128
          %s494 = scalar_lea.vmem [#allocation7], %s493
          %s496 = ssub.s32 2048, 2048
          %497 = vsyncadd %s491, %s496
          %s498 = smul.addr %s39, 16
          %s499 = smul.addr %s498, 128
          %s500 = scalar_lea.hbm %s5, %s499
          %s501 = sshll.u32 %s494, 4
          %s502 = int_to_ptr.vmem [resolvable:$true] %s501
          %507 = dma.hbm_to_vmem [thread:$0]  %s500, 2048, %s502, %s491, 128, 128, 8
        $region40: #{tpu_custom_call.1} parent=15 // pred_fallthru
          _
        // Predicated region
        $region41: #{tpu_custom_call.1} parent=15 // pred_check
          %p508 = pneg %p219
        $region42: #{tpu_custom_call.1} parent=15 // pred_check_branch
          %510 = sbr.rel (%p508) target = $region44
        $region43: #{tpu_custom_call.1} parent=15 // pred_region
          %p511 = scmp.lt.s32.totalorder %s39, 2
          %s512 = scalar_select %p511, %s39, 2
          %s513 = scalar_lea.vmem %s6, %s512
        $region44: #{tpu_custom_call.1} parent=15 // pred_fallthru
          _
        // Predicated region
        $region45: #{tpu_custom_call.1} parent=15 // pred_check
          %p514 = pneg %p245
        $region46: #{tpu_custom_call.1} parent=15 // pred_check_branch
          %516 = sbr.rel (%p514) target = $region48
        $region47: #{tpu_custom_call.1} parent=15 // pred_region
          %p517 = scmp.lt.s32.totalorder %s39, 2
          %s518 = scalar_select %p517, %s39, 2
          %s519 = scalar_lea.vmem %s7, %s518
        $region48: #{tpu_custom_call.1} parent=15 // pred_fallthru
          _
        // Predicated region
        $region49: #{tpu_custom_call.1} parent=15 // pred_check
          %p520 = pneg %p271
        $region50: #{tpu_custom_call.1} parent=15 // pred_check_branch
          %522 = sbr.rel (%p520) target = $region52
        $region51: #{tpu_custom_call.1} parent=15 // pred_region
          %p523 = scmp.lt.s32.totalorder %s39, 2
          %s524 = scalar_select %p523, %s39, 2
          %s525 = scalar_lea.vmem %s8, %s524
        $region52: #{tpu_custom_call.1} parent=15 // pred_fallthru
          _
        // Predicated region
        $region53: #{tpu_custom_call.1} parent=15 // pred_check
          %p526 = pneg %p297
        $region54: #{tpu_custom_call.1} parent=15 // pred_check_branch
          %528 = sbr.rel (%p526) target = $region56
        $region55: #{tpu_custom_call.1} parent=15 // pred_region
          %p529 = scmp.lt.s32.totalorder %s39, 2
          %s530 = scalar_select %p529, %s39, 2
          %s531 = smul.addr %s530, 2
          %s532 = smul.addr %s531, 8
          %s533 = scalar_lea.vmem %s9, %s532
        $region56: #{tpu_custom_call.1} parent=15 // pred_fallthru
          _
        // Predicated region
        $region57: #{tpu_custom_call.1} parent=15 // pred_check
          %p534 = pneg %p323
        $region58: #{tpu_custom_call.1} parent=15 // pred_check_branch
          %536 = sbr.rel (%p534) target = $region60
        $region59: #{tpu_custom_call.1} parent=15 // pred_region
          %p537 = scmp.lt.s32.totalorder %s39, 2
          %s538 = scalar_select %p537, %s39, 2
          %s539 = smul.addr %s538, 2
          %s540 = smul.addr %s539, 8
          %s541 = scalar_lea.vmem %s10, %s540
        $region60: #{tpu_custom_call.1} parent=15 // pred_fallthru
          _
        // Predicated region
        $region61: #{tpu_custom_call.1} parent=15 // pred_check
          %p542 = pneg %p349
        $region62: #{tpu_custom_call.1} parent=15 // pred_check_branch
          %544 = sbr.rel (%p542) target = $region64
        $region63: #{tpu_custom_call.1} parent=15 // pred_region
          %s545 = sand.u32 %s339, 1
          %s546 = scalar_lea.sflag [#allocation9], %s545
          %s547 = sand.u32 %s339, 1
          %s548 = smul.addr %s547, 128
          %s549 = scalar_lea.vmem [#allocation8], %s548
          %s551 = ssub.s32 2048, 2048
          %552 = vsyncadd %s546, %s551
          %s553 = smul.addr %s39, 16
          %s554 = smul.addr %s553, 128
          %s555 = scalar_lea.hbm %s11, %s554
          %s556 = sshll.u32 %s549, 4
          %s557 = int_to_ptr.vmem [resolvable:$true] %s556
          %562 = dma.hbm_to_vmem [thread:$0]  %s555, 2048, %s557, %s546, 128, 128, 8
        $region64: #{tpu_custom_call.1} parent=15 // pred_fallthru
          _
        // Predicated region
        $region65: #{tpu_custom_call.1} parent=15 // pred_check
          %p563 = pneg %p375
        $region66: #{tpu_custom_call.1} parent=15 // pred_check_branch
          %565 = sbr.rel (%p563) target = $region68
        $region67: #{tpu_custom_call.1} parent=15 // pred_region
          %p566 = scmp.lt.s32.totalorder %s39, 2
          %s567 = scalar_select %p566, %s39, 2
          %s568 = scalar_lea.vmem %s12, %s567
        $region68: #{tpu_custom_call.1} parent=15 // pred_fallthru
          _
      $region16: #{tpu_custom_call.1} parent=5 // pred_fallthru
        _
      %p569 = scmp.le.s32.totalorder 1, %s31
      %p570 = scmp.lt.s32.totalorder %s31, 7
      %p571 = pnand %p569, %p570
      %p572 = pneg %p571
      // Predicated region
      $region69: #{tpu_custom_call.1} parent=5 // pred_check
        _
      $region70: #{tpu_custom_call.1} parent=5 // pred_check_branch
        %574 = sbr.rel (%p571) target = $region72
      $region71: #{tpu_custom_call.1} parent=5 // pred_region
        %s575 = ssub.s32 %s31, 1
        %s576 = sand.u32 %s56, 1
        %s577 = scalar_lea.sflag [#allocation3], %s576
        %s578 = sand.u32 %s56, 1
        %s579 = smul.addr %s578, 32
        %s580 = scalar_lea.vmem [#allocation2], %s579
        // Predicated region
        $region73: #{tpu_custom_call.1} parent=71 // pred_check
          %p581 = pneg %p69
        $region74: #{tpu_custom_call.1} parent=71 // pred_check_branch
          %583 = sbr.rel (%p581) target = $region76
        $region75: #{tpu_custom_call.1} parent=71 // pred_region
          %584 = dma.done %s577, 512
        $region76: #{tpu_custom_call.1} parent=71 // pred_fallthru
          _
        %s585 = sand.u32 %s36, 1
        %s586 = scalar_lea.sflag [#allocation6], %s585
        %s587 = sand.u32 %s134, 1
        %s588 = smul.addr %s587, 128
        %s589 = scalar_lea.vmem [#allocation5], %s588
        // Predicated region
        $region77: #{tpu_custom_call.1} parent=71 // pred_check
          %p590 = pneg %p147
        $region78: #{tpu_custom_call.1} parent=71 // pred_check_branch
          %592 = sbr.rel (%p590) target = $region80
        $region79: #{tpu_custom_call.1} parent=71 // pred_region
          %593 = dma.done %s586, 2048
        $region80: #{tpu_custom_call.1} parent=71 // pred_fallthru
          _
        %s594 = sand.u32 %s36, 1
        %s595 = scalar_lea.sflag [#allocation6], %s594
        %s596 = sand.u32 %s186, 1
        %s597 = smul.addr %s596, 128
        %s598 = scalar_lea.vmem [#allocation7], %s597
        // Predicated region
        $region81: #{tpu_custom_call.1} parent=71 // pred_check
          %p599 = pneg %p199
        $region82: #{tpu_custom_call.1} parent=71 // pred_check_branch
          %601 = sbr.rel (%p599) target = $region84
        $region83: #{tpu_custom_call.1} parent=71 // pred_region
          %602 = dma.done %s595, 2048
        $region84: #{tpu_custom_call.1} parent=71 // pred_fallthru
          _
        %s603 = sand.u32 %s342, 1
        %s604 = scalar_lea.sflag [#allocation9], %s603
        %s605 = sand.u32 %s342, 1
        %s606 = smul.addr %s605, 128
        %s607 = scalar_lea.vmem [#allocation8], %s606
        // Predicated region
        $region85: #{tpu_custom_call.1} parent=71 // pred_check
          %p608 = pneg %p355
        $region86: #{tpu_custom_call.1} parent=71 // pred_check_branch
          %610 = sbr.rel (%p608) target = $region88
        $region87: #{tpu_custom_call.1} parent=71 // pred_region
          %611 = dma.done %s604, 2048
        $region88: #{tpu_custom_call.1} parent=71 // pred_fallthru
          _
        %s612 = sand.u32 %s56, 1
        %s613 = scalar_lea.sflag [#allocation3], %s612
        %s614 = sand.u32 %s56, 1
        %s615 = smul.addr %s614, 32
        %s616 = scalar_lea.vmem [#allocation2], %s615
        %p617 = pneg %p69
        %p618 = pneg %p66
        %p619 = scmp.lt.s32.totalorder %s41, 2
        %s620 = scalar_select %p619, %s41, 2
        %s621 = scalar_lea.vmem %s1, %s620
        %p622 = pneg %p95
        %p623 = pneg %p92
        %p624 = scmp.lt.s32.totalorder %s41, 2
        %s625 = scalar_select %p624, %s41, 2
        %s626 = scalar_lea.vmem %s2, %s625
        %p627 = pneg %p121
        %p628 = pneg %p118
        %s629 = sand.u32 %s36, 1
        %s630 = scalar_lea.sflag [#allocation6], %s629
        %s631 = sand.u32 %s134, 1
        %s632 = smul.addr %s631, 128
        %s633 = scalar_lea.vmem [#allocation5], %s632
        %p634 = pneg %p147
        %p635 = pneg %p144
        %p636 = scmp.lt.s32.totalorder %s41, 2
        %s637 = scalar_select %p636, %s41, 2
        %s638 = scalar_lea.vmem %s4, %s637
        %p639 = pneg %p173
        %p640 = pneg %p170
        %s641 = sand.u32 %s36, 1
        %s642 = scalar_lea.sflag [#allocation6], %s641
        %s643 = sand.u32 %s186, 1
        %s644 = smul.addr %s643, 128
        %s645 = scalar_lea.vmem [#allocation7], %s644
        %p646 = pneg %p199
        %p647 = pneg %p196
        %p648 = scmp.lt.s32.totalorder %s41, 2
        %s649 = scalar_select %p648, %s41, 2
        %s650 = scalar_lea.vmem %s6, %s649
        %p651 = pneg %p225
        %p652 = pneg %p222
        %p653 = scmp.lt.s32.totalorder %s41, 2
        %s654 = scalar_select %p653, %s41, 2
        %s655 = scalar_lea.vmem %s7, %s654
        %p656 = pneg %p251
        %p657 = pneg %p248
        %p658 = scmp.lt.s32.totalorder %s41, 2
        %s659 = scalar_select %p658, %s41, 2
        %s660 = scalar_lea.vmem %s8, %s659
        %p661 = pneg %p277
        %p662 = pneg %p274
        %p663 = scmp.lt.s32.totalorder %s41, 2
        %s664 = scalar_select %p663, %s41, 2
        %s665 = smul.addr %s664, 2
        %s666 = smul.addr %s665, 8
        %s667 = scalar_lea.vmem %s9, %s666
        %p668 = pneg %p303
        %p669 = pneg %p300
        %p670 = scmp.lt.s32.totalorder %s41, 2
        %s671 = scalar_select %p670, %s41, 2
        %s672 = smul.addr %s671, 2
        %s673 = smul.addr %s672, 8
        %s674 = scalar_lea.vmem %s10, %s673
        %p675 = pneg %p329
        %p676 = pneg %p326
        %s677 = sand.u32 %s342, 1
        %s678 = scalar_lea.sflag [#allocation9], %s677
        %s679 = sand.u32 %s342, 1
        %s680 = smul.addr %s679, 128
        %s681 = scalar_lea.vmem [#allocation8], %s680
        %p682 = pneg %p355
        %p683 = pneg %p352
        %p684 = scmp.lt.s32.totalorder %s41, 2
        %s685 = scalar_select %p684, %s41, 2
        %s686 = scalar_lea.vmem %s12, %s685
        %p687 = pneg %p381
        %p688 = pneg %p378
        %p689 = pneg %p407
        %p690 = pneg %p404
        %s691 = sand.u32 %s394, 1
        %s692 = scalar_lea.sflag [#allocation4], %s691
        %s693 = sand.u32 %s394, 1
        %s694 = smul.addr %s693, 32
        %s695 = scalar_lea.vmem [#allocation10], %s694
        %s696 = smul.u32 2, %s40
        %p697 = scmp.lt.s32.totalorder %s41, 2
        %s698 = scalar_select %p697, %s41, 2
        %s699 = scalar_lea.vmem %s1, %s698
        %p700 = scmp.lt.s32.totalorder %s41, 2
        %s701 = scalar_select %p700, %s41, 2
        %s702 = scalar_lea.vmem %s2, %s701
        %p703 = scmp.lt.s32.totalorder %s41, 2
        %s704 = scalar_select %p703, %s41, 2
        %s705 = scalar_lea.vmem %s4, %s704
        %p706 = scmp.lt.s32.totalorder %s41, 2
        %s707 = scalar_select %p706, %s41, 2
        %s708 = scalar_lea.vmem %s6, %s707
        %p709 = scmp.lt.s32.totalorder %s41, 2
        %s710 = scalar_select %p709, %s41, 2
        %s711 = scalar_lea.vmem %s7, %s710
        %p712 = scmp.lt.s32.totalorder %s41, 2
        %s713 = scalar_select %p712, %s41, 2
        %s714 = scalar_lea.vmem %s8, %s713
        %p715 = scmp.lt.s32.totalorder %s41, 2
        %s716 = scalar_select %p715, %s41, 2
        %s717 = smul.addr %s716, 2
        %s718 = smul.addr %s717, 8
        %s719 = scalar_lea.vmem %s9, %s718
        %p720 = scmp.lt.s32.totalorder %s41, 2
        %s721 = scalar_select %p720, %s41, 2
        %s722 = smul.addr %s721, 2
        %s723 = smul.addr %s722, 8
        %s724 = scalar_lea.vmem %s10, %s723
        %p725 = scmp.lt.s32.totalorder %s41, 2
        %s726 = scalar_select %p725, %s41, 2
        %s727 = scalar_lea.vmem %s12, %s726
        %s728 = smul.u32 2, %s40
        %p729 = scmp.eq.s32.totalorder %s41, 0
        // Predicated region
        $region89: #{tpu_custom_call.1} parent=71 // pred_check
          %p730 = pneg %p729
        $region90: #{tpu_custom_call.1} parent=71 // pred_check_branch
          %732 = sbr.rel (%p730) target = $region92
        $region91: #{tpu_custom_call.1} parent=71 // pred_region
          %v733 = vld [vmem:[%s580] sm:$0xff]
          %v734 = vld [vmem:[%s580 + $0x8] sm:$0xff]
          %v735 = vld [vmem:[%s580 + $0x10] sm:$0xff]
          %v736 = vld [vmem:[%s580 + $0x18] sm:$0xff]
          %737 = vst [vmem:[%s695] sm:$0xff] %v733
          %738 = vst [vmem:[%s695 + $0x8] sm:$0xff] %v734
          %739 = vst [vmem:[%s695 + $0x10] sm:$0xff] %v735
          %740 = vst [vmem:[%s695 + $0x18] sm:$0xff] %v736
        $region92: #{tpu_custom_call.1} parent=71 // pred_fallthru
          _
        %v741 = vld [vmem:[%s695] sm:$0xff]
        %v742 = vld [vmem:[%s695 + $0x8] sm:$0xff]
        %v743 = vld [vmem:[%s695 + $0x10] sm:$0xff]
        %v744 = vld [vmem:[%s695 + $0x18] sm:$0xff]
        %v745 = vld [vmem:[%s699] sm:$0x1]
        %v746 = vld [vmem:[%s702] sm:$0x1]
        %747 = vadd.xlane.f32.xlu0 %v741
        %v748 = vpop.xlane.xlu0 %747
        %749 = vadd.xlane.f32.xlu0 %v742
        %v750 = vpop.xlane.xlu0 %749
        %751 = vadd.xlane.f32.xlu0 %v743
        %v752 = vpop.xlane.xlu0 %751
        %753 = vadd.xlane.f32.xlu0 %v744
        %v754 = vpop.xlane.xlu0 %753
        %v755 = vrcp.pop 128.0
        %v756 = vmul.f32 %v748, %v755
        %v757 = vmul.f32 %v750, %v755
        %v758 = vmul.f32 %v752, %v755
        %v759 = vmul.f32 %v754, %v755
        %v760 = vsub.f32 %v741, %v756
        %v761 = vsub.f32 %v742, %v757
        %v762 = vsub.f32 %v743, %v758
        %v763 = vsub.f32 %v744, %v759
        %v764 = vmul.f32 %v760, %v760
        %v765 = vmul.f32 %v761, %v761
        %v766 = vmul.f32 %v762, %v762
        %v767 = vmul.f32 %v763, %v763
        %768 = vadd.xlane.f32.xlu0 %v764
        %v769 = vpop.xlane.xlu0 %768
        %770 = vadd.xlane.f32.xlu0 %v765
        %v771 = vpop.xlane.xlu0 %770
        %772 = vadd.xlane.f32.xlu0 %v766
        %v773 = vpop.xlane.xlu0 %772
        %774 = vadd.xlane.f32.xlu0 %v767
        %v775 = vpop.xlane.xlu0 %774
        %v776 = vmul.f32 %v769, %v755
        %v777 = vmul.f32 %v771, %v755
        %v778 = vmul.f32 %v773, %v755
        %v779 = vmul.f32 %v775, %v755
        %v780 = vadd.f32 %v776, 1e-05
        %v781 = vadd.f32 %v777, 1e-05
        %v782 = vadd.f32 %v778, 1e-05
        %v783 = vadd.f32 %v779, 1e-05
        %v784 = vrsqrt.pop %v780
        %v785 = vrsqrt.pop %v781
        %v786 = vrsqrt.pop %v782
        %v787 = vrsqrt.pop %v783
        %v788 = vmul.f32 %v760, %v784
        %v789 = vmul.f32 %v761, %v785
        %v790 = vmul.f32 %v762, %v786
        %v791 = vmul.f32 %v763, %v787
        %v793 = vlaneseq
        %v794 = vshrl.u32 %v793, 7
        %v795 = vsub.s32 0, %v794
        %v796 = vrot.slane %v745, %v795
        %v798 = vmul.f32 %v788, %v796
        %v799 = vmul.f32 %v789, %v796
        %v800 = vmul.f32 %v790, %v796
        %v801 = vmul.f32 %v791, %v796
        %v803 = vlaneseq
        %v804 = vshrl.u32 %v803, 7
        %v805 = vsub.s32 0, %v804
        %v806 = vrot.slane %v746, %v805
        %v808 = vadd.f32 %v798, %v806
        %v809 = vadd.f32 %v799, %v806
        %v810 = vadd.f32 %v800, %v806
        %v811 = vadd.f32 %v801, %v806
        %v812 = vld [vmem:[%s589] sm:$0xff]
        %v813 = vld [vmem:[%s589 + $0x8] sm:$0xff]
        %v814 = vld [vmem:[%s589 + $0x10] sm:$0xff]
        %v815 = vld [vmem:[%s589 + $0x18] sm:$0xff]
        %v816 = vld [vmem:[%s589 + $0x20] sm:$0xff]
        %v817 = vld [vmem:[%s589 + $0x28] sm:$0xff]
        %v818 = vld [vmem:[%s589 + $0x30] sm:$0xff]
        %v819 = vld [vmem:[%s589 + $0x38] sm:$0xff]
        %v820 = vld [vmem:[%s589 + $0x40] sm:$0xff]
        %v821 = vld [vmem:[%s589 + $0x48] sm:$0xff]
        %v822 = vld [vmem:[%s589 + $0x50] sm:$0xff]
        %v823 = vld [vmem:[%s589 + $0x58] sm:$0xff]
        %v824 = vld [vmem:[%s589 + $0x60] sm:$0xff]
        %v825 = vld [vmem:[%s589 + $0x68] sm:$0xff]
        %v826 = vld [vmem:[%s589 + $0x70] sm:$0xff]
        %v827 = vld [vmem:[%s589 + $0x78] sm:$0xff]
        %v828 = vld [vmem:[%s705] sm:$0x1]
        %v830 = vlaneseq
        %v831 = vshrl.u32 %v830, 7
        %v832 = vsub.s32 0, %v831
        %v833 = vrot.slane %v828, %v832
        %835 = vmatprep.subr.mxu0 0.0
        %836 = vmatpush1.msra.mxu0 %v827
        %837 = vmatprep.subr.mxu0 0.0
        %838 = vmatpush1.msra.mxu0 %v826
        %839 = vmatprep.subr.mxu0 0.0
        %840 = vmatpush1.msra.mxu0 %v825
        %841 = vmatprep.subr.mxu0 0.0
        %842 = vmatpush1.msra.mxu0 %v824
        %843 = vmatprep.subr.mxu0 0.0
        %844 = vmatpush1.msra.mxu0 %v823
        %845 = vmatprep.subr.mxu0 0.0
        %846 = vmatpush1.msra.mxu0 %v822
        %847 = vmatprep.subr.mxu0 0.0
        %848 = vmatpush1.msra.mxu0 %v821
        %849 = vmatprep.subr.mxu0 0.0
        %850 = vmatpush1.msra.mxu0 %v820
        %851 = vmatprep.subr.mxu0 0.0
        %852 = vmatpush1.msra.mxu0 %v819
        %853 = vmatprep.subr.mxu0 0.0
        %854 = vmatpush1.msra.mxu0 %v818
        %855 = vmatprep.subr.mxu0 0.0
        %856 = vmatpush1.msra.mxu0 %v817
        %857 = vmatprep.subr.mxu0 0.0
        %858 = vmatpush1.msra.mxu0 %v816
        %859 = vmatprep.subr.mxu0 0.0
        %860 = vmatpush1.msra.mxu0 %v815
        %861 = vmatprep.subr.mxu0 0.0
        %862 = vmatpush1.msra.mxu0 %v814
        %863 = vmatprep.subr.mxu0 0.0
        %864 = vmatpush1.msra.mxu0 %v813
        %865 = vmatprep.subr.mxu0 0.0
        %866 = vmatpush1.msra.mxu0 %v812
        %867 = vmatprep.subr.mxu0 0.0
        %868 = vmatpush2.msra.mxu0 0.0
        %869 = vmatprep.subr.mxu0 0.0
        %870 = vmatpush2.msra.mxu0 0.0
        %871 = vmatprep.subr.mxu0 0.0
        %872 = vmatpush2.msra.mxu0 0.0
        %873 = vmatprep.subr.mxu0 0.0
        %874 = vmatpush2.msra.mxu0 0.0
        %875 = vmatprep.subr.mxu0 0.0
        %876 = vmatpush2.msra.mxu0 0.0
        %877 = vmatprep.subr.mxu0 0.0
        %878 = vmatpush2.msra.mxu0 0.0
        %879 = vmatprep.subr.mxu0 0.0
        %880 = vmatpush2.msra.mxu0 0.0
        %881 = vmatprep.subr.mxu0 0.0
        %882 = vmatpush2.msra.mxu0 0.0
        %883 = vmatprep.subr.mxu0 0.0
        %884 = vmatpush2.msra.mxu0 0.0
        %885 = vmatprep.subr.mxu0 0.0
        %886 = vmatpush2.msra.mxu0 0.0
        %887 = vmatprep.subr.mxu0 0.0
        %888 = vmatpush2.msra.mxu0 0.0
        %889 = vmatprep.subr.mxu0 0.0
        %890 = vmatpush2.msra.mxu0 0.0
        %891 = vmatprep.subr.mxu0 0.0
        %892 = vmatpush2.msra.mxu0 0.0
        %893 = vmatprep.subr.mxu0 0.0
        %894 = vmatpush2.msra.mxu0 0.0
        %895 = vmatprep.subr.mxu0 0.0
        %896 = vmatpush2.msra.mxu0 0.0
        %897 = vmatprep.subr.mxu0 0.0
        %898 = vmatpush2.msra.mxu0 0.0
        %899 = vmatprep.mubr.f32.mxu0 0.0
        %900 = vmatmul.mubr.f32.gmra.mxu0 %v808
        %v901 = vpop.f32.mrf.mxu0
        %v902 = vadd.f32 %v833, %v901
        %v903 = vpop.f32.mrf.mxu0
        %904 = vmatprep.mubr.f32.mxu0 0.0
        %905 = vmatmul.mubr.f32.gmra.mxu0 %v809
        %v906 = vpop.f32.mrf.mxu0
        %v907 = vadd.f32 %v833, %v906
        %v908 = vpop.f32.mrf.mxu0
        %909 = vmatprep.mubr.f32.mxu0 0.0
        %910 = vmatmul.mubr.f32.gmra.mxu0 %v810
        %v911 = vpop.f32.mrf.mxu0
        %v912 = vadd.f32 %v833, %v911
        %v913 = vpop.f32.mrf.mxu0
        %914 = vmatprep.mubr.f32.mxu0 0.0
        %915 = vmatmul.mubr.f32.gmra.mxu0 %v811
        %v916 = vpop.f32.mrf.mxu0
        %v917 = vadd.f32 %v833, %v916
        %v918 = vpop.f32.mrf.mxu0
        %919 = vdwg.mxu0
        %v920 = vld [vmem:[%s598] sm:$0xff]
        %v921 = vld [vmem:[%s598 + $0x8] sm:$0xff]
        %v922 = vld [vmem:[%s598 + $0x10] sm:$0xff]
        %v923 = vld [vmem:[%s598 + $0x18] sm:$0xff]
        %v924 = vld [vmem:[%s598 + $0x20] sm:$0xff]
        %v925 = vld [vmem:[%s598 + $0x28] sm:$0xff]
        %v926 = vld [vmem:[%s598 + $0x30] sm:$0xff]
        %v927 = vld [vmem:[%s598 + $0x38] sm:$0xff]
        %v928 = vld [vmem:[%s598 + $0x40] sm:$0xff]
        %v929 = vld [vmem:[%s598 + $0x48] sm:$0xff]
        %v930 = vld [vmem:[%s598 + $0x50] sm:$0xff]
        %v931 = vld [vmem:[%s598 + $0x58] sm:$0xff]
        %v932 = vld [vmem:[%s598 + $0x60] sm:$0xff]
        %v933 = vld [vmem:[%s598 + $0x68] sm:$0xff]
        %v934 = vld [vmem:[%s598 + $0x70] sm:$0xff]
        %v935 = vld [vmem:[%s598 + $0x78] sm:$0xff]
        %v936 = vld [vmem:[%s708] sm:$0x1]
        %v938 = vlaneseq
        %v939 = vshrl.u32 %v938, 7
        %v940 = vsub.s32 0, %v939
        %v941 = vrot.slane %v936, %v940
        %943 = vmatprep.subr.mxu0 0.0
        %944 = vmatpush1.msra.mxu0 %v935
        %945 = vmatprep.subr.mxu0 0.0
        %946 = vmatpush1.msra.mxu0 %v934
        %947 = vmatprep.subr.mxu0 0.0
        %948 = vmatpush1.msra.mxu0 %v933
        %949 = vmatprep.subr.mxu0 0.0
        %950 = vmatpush1.msra.mxu0 %v932
        %951 = vmatprep.subr.mxu0 0.0
        %952 = vmatpush1.msra.mxu0 %v931
        %953 = vmatprep.subr.mxu0 0.0
        %954 = vmatpush1.msra.mxu0 %v930
        %955 = vmatprep.subr.mxu0 0.0
        %956 = vmatpush1.msra.mxu0 %v929
        %957 = vmatprep.subr.mxu0 0.0
        %958 = vmatpush1.msra.mxu0 %v928
        %959 = vmatprep.subr.mxu0 0.0
        %960 = vmatpush1.msra.mxu0 %v927
        %961 = vmatprep.subr.mxu0 0.0
        %962 = vmatpush1.msra.mxu0 %v926
        %963 = vmatprep.subr.mxu0 0.0
        %964 = vmatpush1.msra.mxu0 %v925
        %965 = vmatprep.subr.mxu0 0.0
        %966 = vmatpush1.msra.mxu0 %v924
        %967 = vmatprep.subr.mxu0 0.0
        %968 = vmatpush1.msra.mxu0 %v923
        %969 = vmatprep.subr.mxu0 0.0
        %970 = vmatpush1.msra.mxu0 %v922
        %971 = vmatprep.subr.mxu0 0.0
        %972 = vmatpush1.msra.mxu0 %v921
        %973 = vmatprep.subr.mxu0 0.0
        %974 = vmatpush1.msra.mxu0 %v920
        %975 = vmatprep.subr.mxu0 0.0
        %976 = vmatpush2.msra.mxu0 0.0
        %977 = vmatprep.subr.mxu0 0.0
        %978 = vmatpush2.msra.mxu0 0.0
        %979 = vmatprep.subr.mxu0 0.0
        %980 = vmatpush2.msra.mxu0 0.0
        %981 = vmatprep.subr.mxu0 0.0
        %982 = vmatpush2.msra.mxu0 0.0
        %983 = vmatprep.subr.mxu0 0.0
        %984 = vmatpush2.msra.mxu0 0.0
        %985 = vmatprep.subr.mxu0 0.0
        %986 = vmatpush2.msra.mxu0 0.0
        %987 = vmatprep.subr.mxu0 0.0
        %988 = vmatpush2.msra.mxu0 0.0
        %989 = vmatprep.subr.mxu0 0.0
        %990 = vmatpush2.msra.mxu0 0.0
        %991 = vmatprep.subr.mxu0 0.0
        %992 = vmatpush2.msra.mxu0 0.0
        %993 = vmatprep.subr.mxu0 0.0
        %994 = vmatpush2.msra.mxu0 0.0
        %995 = vmatprep.subr.mxu0 0.0
        %996 = vmatpush2.msra.mxu0 0.0
        %997 = vmatprep.subr.mxu0 0.0
        %998 = vmatpush2.msra.mxu0 0.0
        %999 = vmatprep.subr.mxu0 0.0
        %1000 = vmatpush2.msra.mxu0 0.0
        %1001 = vmatprep.subr.mxu0 0.0
        %1002 = vmatpush2.msra.mxu0 0.0
        %1003 = vmatprep.subr.mxu0 0.0
        %1004 = vmatpush2.msra.mxu0 0.0
        %1005 = vmatprep.subr.mxu0 0.0
        %1006 = vmatpush2.msra.mxu0 0.0
        %1007 = vmatprep.mubr.f32.mxu0 0.0
        %1008 = vmatmul.mubr.f32.gmra.mxu0 %v808
        %v1009 = vpop.f32.mrf.mxu0
        %v1010 = vadd.f32 %v941, %v1009
        %v1011 = vpop.f32.mrf.mxu0
        %1012 = vmatprep.mubr.f32.mxu0 0.0
        %1013 = vmatmul.mubr.f32.gmra.mxu0 %v809
        %v1014 = vpop.f32.mrf.mxu0
        %v1015 = vadd.f32 %v941, %v1014
        %v1016 = vpop.f32.mrf.mxu0
        %1017 = vmatprep.mubr.f32.mxu0 0.0
        %1018 = vmatmul.mubr.f32.gmra.mxu0 %v810
        %v1019 = vpop.f32.mrf.mxu0
        %v1020 = vadd.f32 %v941, %v1019
        %v1021 = vpop.f32.mrf.mxu0
        %1022 = vmatprep.mubr.f32.mxu0 0.0
        %1023 = vmatmul.mubr.f32.gmra.mxu0 %v811
        %v1024 = vpop.f32.mrf.mxu0
        %v1025 = vadd.f32 %v941, %v1024
        %v1026 = vpop.f32.mrf.mxu0
        %1027 = vdwg.mxu0
        %v1028 = vmul.f32 %v902, 0.5
        %v1029 = vmul.f32 %v907, 0.5
        %v1030 = vmul.f32 %v912, 0.5
        %v1031 = vmul.f32 %v917, 0.5
        %v1032 = vmul.f32 %v902, 0.70710677
        %v1033 = vmul.f32 %v907, 0.70710677
        %v1034 = vmul.f32 %v912, 0.70710677
        %v1035 = vmul.f32 %v917, 0.70710677
        %v1036 = verf.f32.pop %v1032
        %v1037 = verf.f32.pop %v1033
        %v1038 = verf.f32.pop %v1034
        %v1039 = verf.f32.pop %v1035
        %v1040 = vadd.f32 %v1036, 1.0
        %v1041 = vadd.f32 %v1037, 1.0
        %v1042 = vadd.f32 %v1038, 1.0
        %v1043 = vadd.f32 %v1039, 1.0
        %v1044 = vmul.f32 %v1028, %v1040
        %v1045 = vmul.f32 %v1029, %v1041
        %v1046 = vmul.f32 %v1030, %v1042
        %v1047 = vmul.f32 %v1031, %v1043
        %v1048 = vmul.f32 %v1010, 0.5
        %v1049 = vmul.f32 %v1015, 0.5
        %v1050 = vmul.f32 %v1020, 0.5
        %v1051 = vmul.f32 %v1025, 0.5
        %v1052 = vmul.f32 %v1010, 0.70710677
        %v1053 = vmul.f32 %v1015, 0.70710677
        %v1054 = vmul.f32 %v1020, 0.70710677
        %v1055 = vmul.f32 %v1025, 0.70710677
        %v1056 = verf.f32.pop %v1052
        %v1057 = verf.f32.pop %v1053
        %v1058 = verf.f32.pop %v1054
        %v1059 = verf.f32.pop %v1055
        %v1060 = vadd.f32 %v1056, 1.0
        %v1061 = vadd.f32 %v1057, 1.0
        %v1062 = vadd.f32 %v1058, 1.0
        %v1063 = vadd.f32 %v1059, 1.0
        %v1064 = vmul.f32 %v1048, %v1060
        %v1065 = vmul.f32 %v1049, %v1061
        %v1066 = vmul.f32 %v1050, %v1062
        %v1067 = vmul.f32 %v1051, %v1063
        %v1068 = vld [vmem:[%s711] sm:$0x1]
        %v1069 = vld [vmem:[%s714] sm:$0x1]
        %1070 = vadd.xlane.f32.xlu0 %v1064
        %v1071 = vpop.xlane.xlu0 %1070
        %1072 = vadd.xlane.f32.xlu0 %v1065
        %v1073 = vpop.xlane.xlu0 %1072
        %1074 = vadd.xlane.f32.xlu0 %v1066
        %v1075 = vpop.xlane.xlu0 %1074
        %1076 = vadd.xlane.f32.xlu0 %v1067
        %v1077 = vpop.xlane.xlu0 %1076
        %v1078 = vmul.f32 %v1071, %v755
        %v1079 = vmul.f32 %v1073, %v755
        %v1080 = vmul.f32 %v1075, %v755
        %v1081 = vmul.f32 %v1077, %v755
        %v1082 = vsub.f32 %v1064, %v1078
        %v1083 = vsub.f32 %v1065, %v1079
        %v1084 = vsub.f32 %v1066, %v1080
        %v1085 = vsub.f32 %v1067, %v1081
        %v1086 = vmul.f32 %v1082, %v1082
        %v1087 = vmul.f32 %v1083, %v1083
        %v1088 = vmul.f32 %v1084, %v1084
        %v1089 = vmul.f32 %v1085, %v1085
        %1090 = vadd.xlane.f32.xlu0 %v1086
        %v1091 = vpop.xlane.xlu0 %1090
        %1092 = vadd.xlane.f32.xlu0 %v1087
        %v1093 = vpop.xlane.xlu0 %1092
        %1094 = vadd.xlane.f32.xlu0 %v1088
        %v1095 = vpop.xlane.xlu0 %1094
        %1096 = vadd.xlane.f32.xlu0 %v1089
        %v1097 = vpop.xlane.xlu0 %1096
        %v1098 = vmul.f32 %v1091, %v755
        %v1099 = vmul.f32 %v1093, %v755
        %v1100 = vmul.f32 %v1095, %v755
        %v1101 = vmul.f32 %v1097, %v755
        %v1102 = vadd.f32 %v1098, 1e-05
        %v1103 = vadd.f32 %v1099, 1e-05
        %v1104 = vadd.f32 %v1100, 1e-05
        %v1105 = vadd.f32 %v1101, 1e-05
        %v1106 = vrsqrt.pop %v1102
        %v1107 = vrsqrt.pop %v1103
        %v1108 = vrsqrt.pop %v1104
        %v1109 = vrsqrt.pop %v1105
        %v1110 = vmul.f32 %v1082, %v1106
        %v1111 = vmul.f32 %v1083, %v1107
        %v1112 = vmul.f32 %v1084, %v1108
        %v1113 = vmul.f32 %v1085, %v1109
        %v1115 = vlaneseq
        %v1116 = vshrl.u32 %v1115, 7
        %v1117 = vsub.s32 0, %v1116
        %v1118 = vrot.slane %v1068, %v1117
        %v1120 = vmul.f32 %v1110, %v1118
        %v1121 = vmul.f32 %v1111, %v1118
        %v1122 = vmul.f32 %v1112, %v1118
        %v1123 = vmul.f32 %v1113, %v1118
        %v1125 = vlaneseq
        %v1126 = vshrl.u32 %v1125, 7
        %v1127 = vsub.s32 0, %v1126
        %v1128 = vrot.slane %v1069, %v1127
        %v1130 = vadd.f32 %v1120, %v1128
        %v1131 = vadd.f32 %v1121, %v1128
        %v1132 = vadd.f32 %v1122, %v1128
        %v1133 = vadd.f32 %v1123, %v1128
        %v1134 = vld [vmem:[%s719] sm:$0xff]
        %v1135 = vld [vmem:[%s719 + $0x8] sm:$0xff]
        %v1136 = vld [vmem:[%s724] sm:$0xff]
        %v1137 = vld [vmem:[%s724 + $0x8] sm:$0xff]
        %1139 = vset.pattern.permute.xlu0 0
        %1140 = vperm.xlu0 %1139, %v1136
        %v1141 = vpop.permute.xlu0 %1140
        %1144 = vset.pattern.permute.xlu0 0
        %1145 = vperm.xlu0 %1144, %v1137
        %v1146 = vpop.permute.xlu0 %1145
        %vm1148 = vcmask 130048
        %v1150 = vsel %vm1148, %v1134, 0
        %v1153 = vsel %vm1148, %v1135, 0
        %1155 = vmatprep.subr.mxu0 0.0
        %1156 = vmatpush1.msra.mxu0 0.0
        %1157 = vmatprep.subr.mxu0 0.0
        %1158 = vmatpush1.msra.mxu0 0.0
        %1159 = vmatprep.subr.mxu0 0.0
        %1160 = vmatpush1.msra.mxu0 0.0
        %1161 = vmatprep.subr.mxu0 0.0
        %1162 = vmatpush1.msra.mxu0 0.0
        %1163 = vmatprep.subr.mxu0 0.0
        %1164 = vmatpush1.msra.mxu0 0.0
        %1165 = vmatprep.subr.mxu0 0.0
        %1166 = vmatpush1.msra.mxu0 0.0
        %1167 = vmatprep.subr.mxu0 0.0
        %1168 = vmatpush1.msra.mxu0 0.0
        %1169 = vmatprep.subr.mxu0 0.0
        %1170 = vmatpush1.msra.mxu0 0.0
        %1171 = vmatprep.subr.mxu0 0.0
        %1172 = vmatpush1.msra.mxu0 0.0
        %1173 = vmatprep.subr.mxu0 0.0
        %1174 = vmatpush1.msra.mxu0 0.0
        %1175 = vmatprep.subr.mxu0 0.0
        %1176 = vmatpush1.msra.mxu0 0.0
        %1177 = vmatprep.subr.mxu0 0.0
        %1178 = vmatpush1.msra.mxu0 0.0
        %1179 = vmatprep.subr.mxu0 0.0
        %1180 = vmatpush1.msra.mxu0 0.0
        %1181 = vmatprep.subr.mxu0 0.0
        %1182 = vmatpush1.msra.mxu0 0.0
        %1183 = vmatprep.subr.mxu0 0.0
        %1184 = vmatpush1.msra.mxu0 %v1131
        %1185 = vmatprep.subr.mxu0 0.0
        %1186 = vmatpush1.msra.mxu0 %v1130
        %1187 = vmatprep.subr.mxu0 0.0
        %1188 = vmatpush2.msra.mxu0 0.0
        %1189 = vmatprep.subr.mxu0 0.0
        %1190 = vmatpush2.msra.mxu0 0.0
        %1191 = vmatprep.subr.mxu0 0.0
        %1192 = vmatpush2.msra.mxu0 0.0
        %1193 = vmatprep.subr.mxu0 0.0
        %1194 = vmatpush2.msra.mxu0 0.0
        %1195 = vmatprep.subr.mxu0 0.0
        %1196 = vmatpush2.msra.mxu0 0.0
        %1197 = vmatprep.subr.mxu0 0.0
        %1198 = vmatpush2.msra.mxu0 0.0
        %1199 = vmatprep.subr.mxu0 0.0
        %1200 = vmatpush2.msra.mxu0 0.0
        %1201 = vmatprep.subr.mxu0 0.0
        %1202 = vmatpush2.msra.mxu0 0.0
        %1203 = vmatprep.subr.mxu0 0.0
        %1204 = vmatpush2.msra.mxu0 0.0
        %1205 = vmatprep.subr.mxu0 0.0
        %1206 = vmatpush2.msra.mxu0 0.0
        %1207 = vmatprep.subr.mxu0 0.0
        %1208 = vmatpush2.msra.mxu0 0.0
        %1209 = vmatprep.subr.mxu0 0.0
        %1210 = vmatpush2.msra.mxu0 0.0
        %1211 = vmatprep.subr.mxu0 0.0
        %1212 = vmatpush2.msra.mxu0 0.0
        %1213 = vmatprep.subr.mxu0 0.0
        %1214 = vmatpush2.msra.mxu0 0.0
        %1215 = vmatprep.subr.mxu0 0.0
        %1216 = vmatpush2.msra.mxu0 0.0
        %1217 = vmatprep.subr.mxu0 0.0
        %1218 = vmatpush2.msra.mxu0 0.0
        %1219 = vmatprep.mubr.f32.mxu0 0.0
        %1220 = vmatmul.mubr.f32.gmra.mxu0 %v1150
        %v1221 = vpop.f32.mrf.mxu0
        %v1222 = vadd.f32 %v1141, %v1221
        %v1223 = vpop.f32.mrf.mxu0
        %1224 = vmatprep.mubr.f32.mxu0 0.0
        %1225 = vmatmul.mubr.f32.gmra.mxu0 %v1153
        %v1226 = vpop.f32.mrf.mxu0
        %v1227 = vadd.f32 %v1146, %v1226
        %v1228 = vpop.f32.mrf.mxu0
        %1229 = vdwg.mxu0
        %v1230 = vmul.f32 %v1044, %v1222
        %v1231 = vmul.f32 %v1045, %v1227
        %1232 = vmatprep.subr.mxu0 0.0
        %1233 = vmatpush1.msra.mxu0 0.0
        %1234 = vmatprep.subr.mxu0 0.0
        %1235 = vmatpush1.msra.mxu0 0.0
        %1236 = vmatprep.subr.mxu0 0.0
        %1237 = vmatpush1.msra.mxu0 0.0
        %1238 = vmatprep.subr.mxu0 0.0
        %1239 = vmatpush1.msra.mxu0 0.0
        %1240 = vmatprep.subr.mxu0 0.0
        %1241 = vmatpush1.msra.mxu0 0.0
        %1242 = vmatprep.subr.mxu0 0.0
        %1243 = vmatpush1.msra.mxu0 0.0
        %1244 = vmatprep.subr.mxu0 0.0
        %1245 = vmatpush1.msra.mxu0 0.0
        %1246 = vmatprep.subr.mxu0 0.0
        %1247 = vmatpush1.msra.mxu0 0.0
        %1248 = vmatprep.subr.mxu0 0.0
        %1249 = vmatpush1.msra.mxu0 0.0
        %1250 = vmatprep.subr.mxu0 0.0
        %1251 = vmatpush1.msra.mxu0 0.0
        %1252 = vmatprep.subr.mxu0 0.0
        %1253 = vmatpush1.msra.mxu0 0.0
        %1254 = vmatprep.subr.mxu0 0.0
        %1255 = vmatpush1.msra.mxu0 0.0
        %1256 = vmatprep.subr.mxu0 0.0
        %1257 = vmatpush1.msra.mxu0 0.0
        %1258 = vmatprep.subr.mxu0 0.0
        %1259 = vmatpush1.msra.mxu0 0.0
        %1260 = vmatprep.subr.mxu0 0.0
        %1261 = vmatpush1.msra.mxu0 %v1133
        %1262 = vmatprep.subr.mxu0 0.0
        %1263 = vmatpush1.msra.mxu0 %v1132
        %1264 = vmatprep.subr.mxu0 0.0
        %1265 = vmatpush2.msra.mxu0 0.0
        %1266 = vmatprep.subr.mxu0 0.0
        %1267 = vmatpush2.msra.mxu0 0.0
        %1268 = vmatprep.subr.mxu0 0.0
        %1269 = vmatpush2.msra.mxu0 0.0
        %1270 = vmatprep.subr.mxu0 0.0
        %1271 = vmatpush2.msra.mxu0 0.0
        %1272 = vmatprep.subr.mxu0 0.0
        %1273 = vmatpush2.msra.mxu0 0.0
        %1274 = vmatprep.subr.mxu0 0.0
        %1275 = vmatpush2.msra.mxu0 0.0
        %1276 = vmatprep.subr.mxu0 0.0
        %1277 = vmatpush2.msra.mxu0 0.0
        %1278 = vmatprep.subr.mxu0 0.0
        %1279 = vmatpush2.msra.mxu0 0.0
        %1280 = vmatprep.subr.mxu0 0.0
        %1281 = vmatpush2.msra.mxu0 0.0
        %1282 = vmatprep.subr.mxu0 0.0
        %1283 = vmatpush2.msra.mxu0 0.0
        %1284 = vmatprep.subr.mxu0 0.0
        %1285 = vmatpush2.msra.mxu0 0.0
        %1286 = vmatprep.subr.mxu0 0.0
        %1287 = vmatpush2.msra.mxu0 0.0
        %1288 = vmatprep.subr.mxu0 0.0
        %1289 = vmatpush2.msra.mxu0 0.0
        %1290 = vmatprep.subr.mxu0 0.0
        %1291 = vmatpush2.msra.mxu0 0.0
        %1292 = vmatprep.subr.mxu0 0.0
        %1293 = vmatpush2.msra.mxu0 0.0
        %1294 = vmatprep.subr.mxu0 0.0
        %1295 = vmatpush2.msra.mxu0 0.0
        %1296 = vmatprep.mubr.f32.mxu0 0.0
        %1297 = vmatmul.mubr.f32.gmra.mxu0 %v1150
        %v1298 = vpop.f32.mrf.mxu0
        %v1299 = vadd.f32 %v1141, %v1298
        %v1300 = vpop.f32.mrf.mxu0
        %1301 = vmatprep.mubr.f32.mxu0 0.0
        %1302 = vmatmul.mubr.f32.gmra.mxu0 %v1153
        %v1303 = vpop.f32.mrf.mxu0
        %v1304 = vadd.f32 %v1146, %v1303
        %v1305 = vpop.f32.mrf.mxu0
        %1306 = vdwg.mxu0
        %v1307 = vmul.f32 %v1046, %v1299
        %v1308 = vmul.f32 %v1047, %v1304
        %v1309 = vld [vmem:[%s607] sm:$0xff]
        %v1310 = vld [vmem:[%s607 + $0x8] sm:$0xff]
        %v1311 = vld [vmem:[%s607 + $0x10] sm:$0xff]
        %v1312 = vld [vmem:[%s607 + $0x18] sm:$0xff]
        %v1313 = vld [vmem:[%s607 + $0x20] sm:$0xff]
        %v1314 = vld [vmem:[%s607 + $0x28] sm:$0xff]
        %v1315 = vld [vmem:[%s607 + $0x30] sm:$0xff]
        %v1316 = vld [vmem:[%s607 + $0x38] sm:$0xff]
        %v1317 = vld [vmem:[%s607 + $0x40] sm:$0xff]
        %v1318 = vld [vmem:[%s607 + $0x48] sm:$0xff]
        %v1319 = vld [vmem:[%s607 + $0x50] sm:$0xff]
        %v1320 = vld [vmem:[%s607 + $0x58] sm:$0xff]
        %v1321 = vld [vmem:[%s607 + $0x60] sm:$0xff]
        %v1322 = vld [vmem:[%s607 + $0x68] sm:$0xff]
        %v1323 = vld [vmem:[%s607 + $0x70] sm:$0xff]
        %v1324 = vld [vmem:[%s607 + $0x78] sm:$0xff]
        %v1325 = vld [vmem:[%s727] sm:$0x1]
        %v1327 = vlaneseq
        %v1328 = vshrl.u32 %v1327, 7
        %v1329 = vsub.s32 0, %v1328
        %v1330 = vrot.slane %v1325, %v1329
        %1332 = vmatprep.subr.mxu0 0.0
        %1333 = vmatpush1.msra.mxu0 %v1324
        %1334 = vmatprep.subr.mxu0 0.0
        %1335 = vmatpush1.msra.mxu0 %v1323
        %1336 = vmatprep.subr.mxu0 0.0
        %1337 = vmatpush1.msra.mxu0 %v1322
        %1338 = vmatprep.subr.mxu0 0.0
        %1339 = vmatpush1.msra.mxu0 %v1321
        %1340 = vmatprep.subr.mxu0 0.0
        %1341 = vmatpush1.msra.mxu0 %v1320
        %1342 = vmatprep.subr.mxu0 0.0
        %1343 = vmatpush1.msra.mxu0 %v1319
        %1344 = vmatprep.subr.mxu0 0.0
        %1345 = vmatpush1.msra.mxu0 %v1318
        %1346 = vmatprep.subr.mxu0 0.0
        %1347 = vmatpush1.msra.mxu0 %v1317
        %1348 = vmatprep.subr.mxu0 0.0
        %1349 = vmatpush1.msra.mxu0 %v1316
        %1350 = vmatprep.subr.mxu0 0.0
        %1351 = vmatpush1.msra.mxu0 %v1315
        %1352 = vmatprep.subr.mxu0 0.0
        %1353 = vmatpush1.msra.mxu0 %v1314
        %1354 = vmatprep.subr.mxu0 0.0
        %1355 = vmatpush1.msra.mxu0 %v1313
        %1356 = vmatprep.subr.mxu0 0.0
        %1357 = vmatpush1.msra.mxu0 %v1312
        %1358 = vmatprep.subr.mxu0 0.0
        %1359 = vmatpush1.msra.mxu0 %v1311
        %1360 = vmatprep.subr.mxu0 0.0
        %1361 = vmatpush1.msra.mxu0 %v1310
        %1362 = vmatprep.subr.mxu0 0.0
        %1363 = vmatpush1.msra.mxu0 %v1309
        %1364 = vmatprep.subr.mxu0 0.0
        %1365 = vmatpush2.msra.mxu0 0.0
        %1366 = vmatprep.subr.mxu0 0.0
        %1367 = vmatpush2.msra.mxu0 0.0
        %1368 = vmatprep.subr.mxu0 0.0
        %1369 = vmatpush2.msra.mxu0 0.0
        %1370 = vmatprep.subr.mxu0 0.0
        %1371 = vmatpush2.msra.mxu0 0.0
        %1372 = vmatprep.subr.mxu0 0.0
        %1373 = vmatpush2.msra.mxu0 0.0
        %1374 = vmatprep.subr.mxu0 0.0
        %1375 = vmatpush2.msra.mxu0 0.0
        %1376 = vmatprep.subr.mxu0 0.0
        %1377 = vmatpush2.msra.mxu0 0.0
        %1378 = vmatprep.subr.mxu0 0.0
        %1379 = vmatpush2.msra.mxu0 0.0
        %1380 = vmatprep.subr.mxu0 0.0
        %1381 = vmatpush2.msra.mxu0 0.0
        %1382 = vmatprep.subr.mxu0 0.0
        %1383 = vmatpush2.msra.mxu0 0.0
        %1384 = vmatprep.subr.mxu0 0.0
        %1385 = vmatpush2.msra.mxu0 0.0
        %1386 = vmatprep.subr.mxu0 0.0
        %1387 = vmatpush2.msra.mxu0 0.0
        %1388 = vmatprep.subr.mxu0 0.0
        %1389 = vmatpush2.msra.mxu0 0.0
        %1390 = vmatprep.subr.mxu0 0.0
        %1391 = vmatpush2.msra.mxu0 0.0
        %1392 = vmatprep.subr.mxu0 0.0
        %1393 = vmatpush2.msra.mxu0 0.0
        %1394 = vmatprep.subr.mxu0 0.0
        %1395 = vmatpush2.msra.mxu0 0.0
        %1396 = vmatprep.mubr.f32.mxu0 0.0
        %1397 = vmatmul.mubr.f32.gmra.mxu0 %v1230
        %v1398 = vpop.f32.mrf.mxu0
        %v1399 = vadd.f32 %v1330, %v1398
        %v1400 = vpop.f32.mrf.mxu0
        %1401 = vmatprep.mubr.f32.mxu0 0.0
        %1402 = vmatmul.mubr.f32.gmra.mxu0 %v1231
        %v1403 = vpop.f32.mrf.mxu0
        %v1404 = vadd.f32 %v1330, %v1403
        %v1405 = vpop.f32.mrf.mxu0
        %1406 = vmatprep.mubr.f32.mxu0 0.0
        %1407 = vmatmul.mubr.f32.gmra.mxu0 %v1307
        %v1408 = vpop.f32.mrf.mxu0
        %v1409 = vadd.f32 %v1330, %v1408
        %v1410 = vpop.f32.mrf.mxu0
        %1411 = vmatprep.mubr.f32.mxu0 0.0
        %1412 = vmatmul.mubr.f32.gmra.mxu0 %v1308
        %v1413 = vpop.f32.mrf.mxu0
        %v1414 = vadd.f32 %v1330, %v1413
        %v1415 = vpop.f32.mrf.mxu0
        %1416 = vdwg.mxu0
        %v1417 = vadd.f32 %v1399, %v741
        %v1418 = vadd.f32 %v1404, %v742
        %v1419 = vadd.f32 %v1409, %v743
        %v1420 = vadd.f32 %v1414, %v744
        %1421 = vst [vmem:[%s695] sm:$0xff] %v1417
        %1422 = vst [vmem:[%s695 + $0x8] sm:$0xff] %v1418
        %1423 = vst [vmem:[%s695 + $0x10] sm:$0xff] %v1419
        %1424 = vst [vmem:[%s695 + $0x18] sm:$0xff] %v1420
        %s1425 = sand.u32 %s394, 1
        %s1426 = scalar_lea.sflag [#allocation4], %s1425
        %s1427 = sand.u32 %s394, 1
        %s1428 = smul.addr %s1427, 32
        %s1429 = scalar_lea.vmem [#allocation10], %s1428
        // Predicated region
        $region93: #{tpu_custom_call.1} parent=71 // pred_check
          %p1430 = pneg %p404
        $region94: #{tpu_custom_call.1} parent=71 // pred_check_branch
          %1432 = sbr.rel (%p1430) target = $region96
        $region95: #{tpu_custom_call.1} parent=71 // pred_region
          %s1433 = smul.u32 2, %s40
          %s1435 = ssub.s32 512, 512
          %1436 = vsyncadd %s1426, %s1435
          %s1437 = smul.addr %s1433, 2
          %s1438 = smul.addr %s1437, 128
          %s1439 = scalar_lea.hbm %s13, %s1438
          %s1440 = sshll.u32 %s1429, 4
          %s1441 = int_to_ptr.vmem [resolvable:$true] %s1440
          %1446 = dma.vmem_to_hbm [thread:$0]  %s1441, 512, %s1439, %s1426, 128, 128, 8
        $region96: #{tpu_custom_call.1} parent=71 // pred_fallthru
          _
      $region72: #{tpu_custom_call.1} parent=5 // pred_fallthru
        _
      %p1447 = scmp.le.s32.totalorder 2, %s31
      // Predicated region
      $region97: #{tpu_custom_call.1} parent=5 // pred_check
        %p1448 = pneg %p1447
      $region98: #{tpu_custom_call.1} parent=5 // pred_check_branch
        %1450 = sbr.rel (%p1448) target = $region100
      $region99: #{tpu_custom_call.1} parent=5 // pred_region
        %s1451 = ssub.s32 %s31, 2
        // Predicated region
        $region101: #{tpu_custom_call.1} parent=99 // pred_check
          %p1452 = pneg %p410
        $region102: #{tpu_custom_call.1} parent=99 // pred_check_branch
          %1454 = sbr.rel (%p1452) target = $region104
        $region103: #{tpu_custom_call.1} parent=99 // pred_region
          %s1455 = sand.u32 %s395, 1
          %s1456 = scalar_lea.sflag [#allocation4], %s1455
          %s1457 = sand.u32 %s395, 1
          %s1458 = smul.addr %s1457, 32
          %s1459 = scalar_lea.vmem [#allocation10], %s1458
          %1460 = dma.done %s1456, 512
        $region104: #{tpu_custom_call.1} parent=99 // pred_fallthru
          _
      $region100: #{tpu_custom_call.1} parent=5 // pred_fallthru
        _
    $region6: #{tpu_custom_call.1} parent=1 // loop_footer
      %s35 = sadd.s32 1, %s31
    $region7: #{tpu_custom_call.1} parent=1 // loop_footer_branch
      %30 = sbr.rel target = $region3
    $region8: #{tpu_custom_call.1} parent=1 // loop_exit
      _
    %1461 = vsyncpa [#allocation3], 1
    %s1462 = scalar_lea.sflag [#allocation3], 1
    %1463 = vsyncpa %s1462, 1
    %1464 = vsyncpa [#allocation6], 1
    %s1465 = scalar_lea.sflag [#allocation6], 1
    %1466 = vsyncpa %s1465, 1
    %1467 = vsyncpa [#allocation9], 1
    %s1468 = scalar_lea.sflag [#allocation9], 1
    %1469 = vsyncpa %s1468, 1
    %1470 = vsyncpa [#allocation4], 1
    %s1471 = scalar_lea.sflag [#allocation4], 1
    %1472 = vsyncpa %s1471, 1

</llo_original>
